<compile_context>
chip_gen: v6e
topology: v6e:2x2x1
jax: 0.10.0
libtpu: 0.0.40
codegen_flags: <defaults>
</compile_context>

<pallas_src>
import functools

import jax
import jax.numpy as jnp
from jax.experimental import pallas as pl
from jax.experimental.pallas import tpu as pltpu

D_IN, H1, H2, D_OUT = 28 * 28, 256, 64, 10
H2P, D_OUT_P = 128, 128          # lane-dense padded dims
NEG_MASK = -1e30                 # bias for padded class columns -> exp() == 0


def mlp_softmax_kernel(x_ref, w1_ref, b1_ref, w2_ref, b2_ref, w3_ref, b3_ref,
                       o_ref):
    x = x_ref[...]                                             # (TB, 784) bf16

    # Linear(784, 256) + ReLU   (bf16 MXU, f32 accumulation)
    h1 = jnp.dot(x, w1_ref[...], preferred_element_type=jnp.float32)
    h1 = jnp.maximum(h1 + b1_ref[...], 0.0).astype(jnp.bfloat16)

    # Linear(256, 128-padded-64) + ReLU (padded cols are exactly 0)
    h2 = jnp.dot(h1, w2_ref[...], preferred_element_type=jnp.float32)
    h2 = jnp.maximum(h2 + b2_ref[...], 0.0).astype(jnp.bfloat16)

    # Linear(64, 10) padded to (128, 128); padded class bias = -1e30
    logits = jnp.dot(h2, w3_ref[...], preferred_element_type=jnp.float32)
    logits = logits + b3_ref[...]                              # (TB, 128) f32

    # Numerically stable softmax over the padded class dim (padded cols -> 0).
    m = jnp.max(logits, axis=-1, keepdims=True)
    e = jnp.exp(logits - m)
    denom = jnp.sum(e, axis=-1, keepdims=True)
    o_ref[...] = e * pl.reciprocal(denom, approx=True)         # EUP reciprocal


def net_forward(x_nchw, packed_params, *, tile_b=512):
    """x_nchw: (B, 1, 28, 28) -> (B, 10) f32 softmax probs.

    packed_params: bf16 weights / f32 biases from pack_params(), already
    padded to lane-dense shapes.
    """
    w1, b1, w2, b2, w3, b3 = packed_params
    assert tile_b % 8 == 0, "tile_b must be a multiple of 8 (256+ recommended)"

    B = x_nchw.shape[0]
    x = x_nchw.reshape(B, D_IN)                    # torch .view(-1, 784)

    # Ragged batch: pad up to a whole number of tiles (padded rows discarded).
    grid_b = pl.cdiv(B, tile_b)
    b_pad = grid_b * tile_b
    if b_pad != B:
        x = jnp.pad(x, ((0, b_pad - B), (0, 0)))
    x = x.astype(jnp.bfloat16)

    # Batch is tiled; parameters are small, index-invariant, and stay resident.
    x_spec = pl.BlockSpec((tile_b, D_IN), lambda i: (i, 0))
    w1_spec = pl.BlockSpec((D_IN, H1), lambda i: (0, 0))
    b1_spec = pl.BlockSpec((1, H1), lambda i: (0, 0))
    w2_spec = pl.BlockSpec((H1, H2P), lambda i: (0, 0))
    b2_spec = pl.BlockSpec((1, H2P), lambda i: (0, 0))
    w3_spec = pl.BlockSpec((H2P, D_OUT_P), lambda i: (0, 0))
    b3_spec = pl.BlockSpec((1, D_OUT_P), lambda i: (0, 0))
    o_spec = pl.BlockSpec((tile_b, D_OUT_P), lambda i: (i, 0))

    flops = 2 * b_pad * (D_IN * H1 + H1 * H2P + H2P * D_OUT_P)
    bytes_accessed = (
        b_pad * D_IN * 2                                  # x (bf16)
        + (D_IN * H1 + H1 * H2P + H2P * D_OUT_P) * 2      # weights (bf16)
        + (H1 + H2P + D_OUT_P) * 4                        # biases (f32)
        + b_pad * D_OUT_P * 4)                            # output (f32)

    out = pl.pallas_call(
        mlp_softmax_kernel,
        out_shape=jax.ShapeDtypeStruct((b_pad, D_OUT_P), jnp.float32),
        grid_spec=pltpu.PrefetchScalarGridSpec(
            num_scalar_prefetch=0,
            grid=(grid_b,),
            in_specs=[x_spec, w1_spec, b1_spec, w2_spec, b2_spec, w3_spec,
                      b3_spec],
            out_specs=o_spec,
        ),
        compiler_params=pltpu.CompilerParams(
            dimension_semantics=("parallel",),
            vmem_limit_bytes=32 * 1024 * 1024,
        ),
        cost_estimate=pl.CostEstimate(
            flops=flops,
            transcendentals=b_pad * D_OUT_P,
            bytes_accessed=bytes_accessed),
    )(x, w1, b1, w2, b2, w3, b3)

    return out[:B, :D_OUT]


def init_params(key):
    """Deterministic synthetic weights with the shapes nn.Linear implies.

    Stored as (in, out) f32; biases as (1, out).
    """
    k1, k2, k3, k4, k5, k6 = jax.random.split(key, 6)
    w1 = jax.random.normal(k1, (D_IN, H1), jnp.float32) * (1.0 / D_IN) ** 0.5
    b1 = jax.random.normal(k2, (1, H1), jnp.float32) * 0.01
    w2 = jax.random.normal(k3, (H1, H2), jnp.float32) * (1.0 / H1) ** 0.5
    b2 = jax.random.normal(k4, (1, H2), jnp.float32) * 0.01
    w3 = jax.random.normal(k5, (H2, D_OUT), jnp.float32) * (1.0 / H2) ** 0.5
    b3 = jax.random.normal(k6, (1, D_OUT), jnp.float32) * 0.01
    return (w1, b1, w2, b2, w3, b3)


def pack_params(params_f32):
    """Pad to lane-dense shapes and cast weights to bf16 (biases stay f32).

    H2 64->128 with zeros (exact: ReLU(0)=0, zero rows of w3 contribute 0).
    Classes 10->128: zero w3 columns + NEG_MASK bias so softmax is exact.
    """
    w1, b1, w2, b2, w3, b3 = params_f32
    w2p = jnp.pad(w2, ((0, 0), (0, H2P - H2)))
    b2p = jnp.pad(b2, ((0, 0), (0, H2P - H2)))
    w3p = jnp.pad(w3, ((0, H2P - H2), (0, D_OUT_P - D_OUT)))
    b3p = jnp.pad(b3, ((0, 0), (0, D_OUT_P - D_OUT)), constant_values=NEG_MASK)
    return (w1.astype(jnp.bfloat16), b1.astype(jnp.float32),
            w2p.astype(jnp.bfloat16), b2p.astype(jnp.float32),
            w3p.astype(jnp.bfloat16), b3p.astype(jnp.float32))


def _reference(x_nchw, packed_params):
    """Plain-JAX reference using the same padded bf16 params (tight check)."""
    w1, b1, w2, b2, w3, b3 = packed_params
    x = x_nchw.reshape(x_nchw.shape[0], D_IN).astype(jnp.bfloat16)
    h1 = jnp.maximum(
        jnp.dot(x, w1, preferred_element_type=jnp.float32) + b1,
        0.0).astype(jnp.bfloat16)
    h2 = jnp.maximum(
        jnp.dot(h1, w2, preferred_element_type=jnp.float32) + b2,
        0.0).astype(jnp.bfloat16)
    logits = jnp.dot(h2, w3, preferred_element_type=jnp.float32) + b3
    return jax.nn.softmax(logits, axis=-1)[:, :D_OUT]


if __name__ == "__main__":
    key = jax.random.PRNGKey(0)
    k_x, k_p = jax.random.split(key)

    B = 8
    x = jax.random.normal(k_x, (B, 1, 28, 28), jnp.float32)   # MNIST-shaped NCHW
    params = init_params(k_p)
    packed = pack_params(params)

    # Small demo batch: it is padded up to one 256-row tile inside the wrapper.
    out = net_forward(x, packed, tile_b=256)
    out = jax.block_until_ready(out)

    ref = _reference(x, packed)
    assert out.shape == (B, D_OUT)
    assert jnp.allclose(out, ref, atol=2e-3, rtol=0), "mismatch vs reference"
    assert jnp.allclose(jnp.sum(out, axis=-1), 1.0, atol=2e-3)

    print("KERNEL_OK")
</pallas_src>

<mosaic_0001>
module attributes {stable_mosaic.version = 11 : i64} {
  func.func @mlp_softmax_kernel(%arg0: i32, %arg1: memref<256x784xbf16, #tpu.memory_space<vmem>>, %arg2: memref<784x256xbf16, #tpu.memory_space<vmem>>, %arg3: memref<1x256xf32, #tpu.memory_space<vmem>>, %arg4: memref<256x128xbf16, #tpu.memory_space<vmem>>, %arg5: memref<1x128xf32, #tpu.memory_space<vmem>>, %arg6: memref<128x128xbf16, #tpu.memory_space<vmem>>, %arg7: memref<1x128xf32, #tpu.memory_space<vmem>>, %arg8: memref<256x128xf32, #tpu.memory_space<vmem>>) attributes {dimension_semantics = [#tpu.dimension_semantics<parallel>], iteration_bounds = array<i64: 1>, scalar_prefetch = 0 : i64, scratch_operands = 0 : i64, tpu.core_type = #tpu.core_type<tc>, window_params = [{transform_indices = @transform_0, window_bounds = array<i64: 256, 784>}, {pipeline_mode = #tpu.pipeline_mode<synchronous>, transform_indices = @transform_1, window_bounds = array<i64: 784, 256>}, {pipeline_mode = #tpu.pipeline_mode<synchronous>, transform_indices = @transform_2, window_bounds = array<i64: 1, 256>}, {pipeline_mode = #tpu.pipeline_mode<synchronous>, transform_indices = @transform_3, window_bounds = array<i64: 256, 128>}, {pipeline_mode = #tpu.pipeline_mode<synchronous>, transform_indices = @transform_4, window_bounds = array<i64: 1, 128>}, {pipeline_mode = #tpu.pipeline_mode<synchronous>, transform_indices = @transform_5, window_bounds = array<i64: 128, 128>}, {pipeline_mode = #tpu.pipeline_mode<synchronous>, transform_indices = @transform_6, window_bounds = array<i64: 1, 128>}, {transform_indices = @transform_7, window_bounds = array<i64: 256, 128>}]} {
    %c0 = arith.constant 0 : index
    %c0_0 = arith.constant 0 : index
    %0 = vector.load %arg1[%c0, %c0_0] : memref<256x784xbf16, #tpu.memory_space<vmem>>, vector<256x784xbf16>
    %c0_1 = arith.constant 0 : index
    %c0_2 = arith.constant 0 : index
    %1 = vector.load %arg2[%c0_1, %c0_2] : memref<784x256xbf16, #tpu.memory_space<vmem>>, vector<784x256xbf16>
    %cst = arith.constant dense<0.000000e+00> : vector<256x256xf32>
    %2 = tpu.matmul %0, %1, %cst {dimension_numbers = #tpu.dot_dimension_numbers<[1], [0], [0], [1], [0, 0, 1, 1], [], []>} : vector<256x784xbf16>, vector<784x256xbf16>, vector<256x256xf32> -> vector<256x256xf32>
    %c0_3 = arith.constant 0 : index
    %c0_4 = arith.constant 0 : index
    %3 = vector.load %arg3[%c0_3, %c0_4] : memref<1x256xf32, #tpu.memory_space<vmem>>, vector<1x256xf32>
    %4 = vector.broadcast %3 : vector<1x256xf32> to vector<256x256xf32>
    %5 = arith.addf %2, %4 : vector<256x256xf32>
    %cst_5 = arith.constant 0.000000e+00 : f32
    %6 = vector.broadcast %cst_5 : f32 to vector<256x256xf32>
    %7 = arith.maximumf %5, %6 : vector<256x256xf32>
    %8 = arith.truncf %7 : vector<256x256xf32> to vector<256x256xbf16>
    %c0_6 = arith.constant 0 : index
    %c0_7 = arith.constant 0 : index
    %9 = vector.load %arg4[%c0_6, %c0_7] : memref<256x128xbf16, #tpu.memory_space<vmem>>, vector<256x128xbf16>
    %cst_8 = arith.constant dense<0.000000e+00> : vector<256x128xf32>
    %10 = tpu.matmul %8, %9, %cst_8 {dimension_numbers = #tpu.dot_dimension_numbers<[1], [0], [0], [1], [0, 0, 1, 1], [], []>} : vector<256x256xbf16>, vector<256x128xbf16>, vector<256x128xf32> -> vector<256x128xf32>
    %c0_9 = arith.constant 0 : index
    %c0_10 = arith.constant 0 : index
    %11 = vector.load %arg5[%c0_9, %c0_10] : memref<1x128xf32, #tpu.memory_space<vmem>>, vector<1x128xf32>
    %12 = vector.broadcast %11 : vector<1x128xf32> to vector<256x128xf32>
    %13 = arith.addf %10, %12 : vector<256x128xf32>
    %cst_11 = arith.constant 0.000000e+00 : f32
    %14 = vector.broadcast %cst_11 : f32 to vector<256x128xf32>
    %15 = arith.maximumf %13, %14 : vector<256x128xf32>
    %16 = arith.truncf %15 : vector<256x128xf32> to vector<256x128xbf16>
    %c0_12 = arith.constant 0 : index
    %c0_13 = arith.constant 0 : index
    %17 = vector.load %arg6[%c0_12, %c0_13] : memref<128x128xbf16, #tpu.memory_space<vmem>>, vector<128x128xbf16>
    %cst_14 = arith.constant dense<0.000000e+00> : vector<256x128xf32>
    %18 = tpu.matmul %16, %17, %cst_14 {dimension_numbers = #tpu.dot_dimension_numbers<[1], [0], [0], [1], [0, 0, 1, 1], [], []>} : vector<256x128xbf16>, vector<128x128xbf16>, vector<256x128xf32> -> vector<256x128xf32>
    %c0_15 = arith.constant 0 : index
    %c0_16 = arith.constant 0 : index
    %19 = vector.load %arg7[%c0_15, %c0_16] : memref<1x128xf32, #tpu.memory_space<vmem>>, vector<1x128xf32>
    %20 = vector.broadcast %19 : vector<1x128xf32> to vector<256x128xf32>
    %21 = arith.addf %18, %20 : vector<256x128xf32>
    %cst_17 = arith.constant dense<0xFF800000> : vector<256xf32>
    %22 = vector.multi_reduction <maximumf>, %21, %cst_17 [1] : vector<256x128xf32> to vector<256xf32>
    %23 = vector.shape_cast %22 : vector<256xf32> to vector<256x1xf32>
    %24 = vector.broadcast %23 : vector<256x1xf32> to vector<256x128xf32>
    %25 = arith.subf %21, %24 : vector<256x128xf32>
    %26 = math.exp %25 : vector<256x128xf32>
    %cst_18 = arith.constant dense<0.000000e+00> : vector<256xf32>
    %27 = vector.multi_reduction <add>, %26, %cst_18 [1] : vector<256x128xf32> to vector<256xf32>
    %28 = vector.shape_cast %27 : vector<256xf32> to vector<256x1xf32>
    %29 = tpu.reciprocal %28 {approx = true} : vector<256x1xf32> -> vector<256x1xf32>
    %30 = vector.broadcast %29 : vector<256x1xf32> to vector<256x128xf32>
    %31 = arith.mulf %26, %30 : vector<256x128xf32>
    %c0_19 = arith.constant 0 : index
    %c0_20 = arith.constant 0 : index
    %32 = vector.load %arg8[%c0_19, %c0_20] : memref<256x128xf32, #tpu.memory_space<vmem>>, vector<256x128xf32>
    tpu.vector_store %arg8[%c0_19, %c0_20], %31 {strides = array<i32>} : memref<256x128xf32, #tpu.memory_space<vmem>>, vector<256x128xf32>,
    return
  }
  func.func @transform_0(%arg0: i32) -> (i32, i32) {
    %c0_i32 = arith.constant 0 : i32
    %c0_i32_0 = arith.constant 0 : i32
    return %arg0, %c0_i32 : i32, i32
  }
  func.func @transform_1(%arg0: i32) -> (i32, i32) {
    %c0_i32 = arith.constant 0 : i32
    %c0_i32_0 = arith.constant 0 : i32
    %c0_i32_1 = arith.constant 0 : i32
    return %c0_i32, %c0_i32_0 : i32, i32
  }
  func.func @transform_2(%arg0: i32) -> (i32, i32) {
    %c0_i32 = arith.constant 0 : i32
    %c0_i32_0 = arith.constant 0 : i32
    %c0_i32_1 = arith.constant 0 : i32
    return %c0_i32, %c0_i32_0 : i32, i32
  }
  func.func @transform_3(%arg0: i32) -> (i32, i32) {
    %c0_i32 = arith.constant 0 : i32
    %c0_i32_0 = arith.constant 0 : i32
    %c0_i32_1 = arith.constant 0 : i32
    return %c0_i32, %c0_i32_0 : i32, i32
  }
  func.func @transform_4(%arg0: i32) -> (i32, i32) {
    %c0_i32 = arith.constant 0 : i32
    %c0_i32_0 = arith.constant 0 : i32
    %c0_i32_1 = arith.constant 0 : i32
    return %c0_i32, %c0_i32_0 : i32, i32
  }
  func.func @transform_5(%arg0: i32) -> (i32, i32) {
    %c0_i32 = arith.constant 0 : i32
    %c0_i32_0 = arith.constant 0 : i32
    %c0_i32_1 = arith.constant 0 : i32
    return %c0_i32, %c0_i32_0 : i32, i32
  }
  func.func @transform_6(%arg0: i32) -> (i32, i32) {
    %c0_i32 = arith.constant 0 : i32
    %c0_i32_0 = arith.constant 0 : i32
    %c0_i32_1 = arith.constant 0 : i32
    return %c0_i32, %c0_i32_0 : i32, i32
  }
  func.func @transform_7(%arg0: i32) -> (i32, i32) {
    %c0_i32 = arith.constant 0 : i32
    %c0_i32_0 = arith.constant 0 : i32
    return %arg0, %c0_i32 : i32, i32
  }
}

</mosaic_0001>

<llo_original>
// kernel: tpu_custom_call.1
$region0: #{tpu_custom_call.1}
  #allocation0 [shape = 'u32[]', space=smem, size = 0x4, offset = 0x4, fixed_abs, tag = 'smem constant byte address 0x4 - core index']
  #allocation1 [shape = 'u32[144,128]{1,0:T(1,128)}', space=vmem, size = 0x12000, scoped, tag = 'internal scratch']
  %s0 = inlined_call_operand.vmem [shape: bf16[256,784], index: 0, kind: input, shape index: {}]
  %s1 = inlined_call_operand.vmem [shape: bf16[784,256], index: 1, kind: input, shape index: {}]
  %s2 = inlined_call_operand.vmem [shape: f32[1,256], index: 2, kind: input, shape index: {}]
  %s3 = inlined_call_operand.vmem [shape: bf16[256,128], index: 3, kind: input, shape index: {}]
  %s4 = inlined_call_operand.vmem [shape: f32[1,128], index: 4, kind: input, shape index: {}]
  %s5 = inlined_call_operand.vmem [shape: bf16[128,128], index: 5, kind: input, shape index: {}]
  %s6 = inlined_call_operand.vmem [shape: f32[1,128], index: 6, kind: input, shape index: {}]
  %s7 = inlined_call_operand.hbm [shape: f32[256,128], index: 7, kind: output, shape index: {}]
  %s8 = sld [smem:[#allocation0]]
  $region38: #{tpu_custom_call.1} parent=0
    _
  %s10 = ssub.s32 1, %s8
  %s11 = scalar_select 0, %s10, %s8
  $region1: #{tpu_custom_call.1} parent=0
    #allocation2 [shape = 'u8[131072]{0}', space=vmem, size = 0x20000, scoped, tag = 'output window, operand 0, single buffered']
    #allocation3 [shape = 's32[1]{0}', space=sflag, size = 0x4, scoped, tag = 'scoped memory for tpu_custom_call.1']
    %12 = vsyncpa [#allocation3], 0
    // Predicated region
    $region2: #{tpu_custom_call.1} parent=1 // pred_check
      _
    $region3: #{tpu_custom_call.1} parent=1 // pred_check_branch
      %14 = sbr.rel (0) target = $region5
    $region4: #{tpu_custom_call.1} parent=1 // pred_region
      _
    $region5: #{tpu_custom_call.1} parent=1 // pred_fallthru
      _
    // Predicated region
    $region6: #{tpu_custom_call.1} parent=1 // pred_check
      _
    $region7: #{tpu_custom_call.1} parent=1 // pred_check_branch
      %16 = sbr.rel (0) target = $region9
    $region8: #{tpu_custom_call.1} parent=1 // pred_region
      _
    $region9: #{tpu_custom_call.1} parent=1 // pred_fallthru
      _
    // Predicated region
    $region10: #{tpu_custom_call.1} parent=1 // pred_check
      _
    $region11: #{tpu_custom_call.1} parent=1 // pred_check_branch
      %18 = sbr.rel (0) target = $region13
    $region12: #{tpu_custom_call.1} parent=1 // pred_region
      _
    $region13: #{tpu_custom_call.1} parent=1 // pred_fallthru
      _
    // Predicated region
    $region14: #{tpu_custom_call.1} parent=1 // pred_check
      _
    $region15: #{tpu_custom_call.1} parent=1 // pred_check_branch
      %20 = sbr.rel (0) target = $region17
    $region16: #{tpu_custom_call.1} parent=1 // pred_region
      _
    $region17: #{tpu_custom_call.1} parent=1 // pred_fallthru
      _
    // Predicated region
    $region18: #{tpu_custom_call.1} parent=1 // pred_check
      _
    $region19: #{tpu_custom_call.1} parent=1 // pred_check_branch
      %22 = sbr.rel (0) target = $region21
    $region20: #{tpu_custom_call.1} parent=1 // pred_region
      _
    $region21: #{tpu_custom_call.1} parent=1 // pred_fallthru
      _
    // Predicated region
    $region22: #{tpu_custom_call.1} parent=1 // pred_check
      _
    $region23: #{tpu_custom_call.1} parent=1 // pred_check_branch
      %24 = sbr.rel (0) target = $region25
    $region24: #{tpu_custom_call.1} parent=1 // pred_region
      _
    $region25: #{tpu_custom_call.1} parent=1 // pred_fallthru
      _
    // Predicated region
    $region26: #{tpu_custom_call.1} parent=1 // pred_check
      _
    $region27: #{tpu_custom_call.1} parent=1 // pred_check_branch
      %26 = sbr.rel (0) target = $region29
    $region28: #{tpu_custom_call.1} parent=1 // pred_region
      _
    $region29: #{tpu_custom_call.1} parent=1 // pred_fallthru
      _
    %v28 = vld [vmem:[%s0] sm:$0xff]
    %v29 = vld [vmem:[%s0 + $0x8] sm:$0xff]
    %v30 = vld [vmem:[%s0 + $0x10] sm:$0xff]
    %v31 = vld [vmem:[%s0 + $0x18] sm:$0xf]
    %v32 = vld [vmem:[%s0 + $0x1c] sm:$0xff]
    %v33 = vld [vmem:[%s0 + $0x24] sm:$0xff]
    %v34 = vld [vmem:[%s0 + $0x2c] sm:$0xff]
    %v35 = vld [vmem:[%s0 + $0x34] sm:$0xf]
    %v36 = vld [vmem:[%s0 + $0x38] sm:$0xff]
    %v37 = vld [vmem:[%s0 + $0x40] sm:$0xff]
    %v38 = vld [vmem:[%s0 + $0x48] sm:$0xff]
    %v39 = vld [vmem:[%s0 + $0x50] sm:$0xf]
    %v40 = vld [vmem:[%s0 + $0x54] sm:$0xff]
    %v41 = vld [vmem:[%s0 + $0x5c] sm:$0xff]
    %v42 = vld [vmem:[%s0 + $0x64] sm:$0xff]
    %v43 = vld [vmem:[%s0 + $0x6c] sm:$0xf]
    %v44 = vld [vmem:[%s0 + $0x70] sm:$0xff]
    %v45 = vld [vmem:[%s0 + $0x78] sm:$0xff]
    %v46 = vld [vmem:[%s0 + $0x80] sm:$0xff]
    %v47 = vld [vmem:[%s0 + $0x88] sm:$0xf]
    %v48 = vld [vmem:[%s0 + $0x8c] sm:$0xff]
    %v49 = vld [vmem:[%s0 + $0x94] sm:$0xff]
    %v50 = vld [vmem:[%s0 + $0x9c] sm:$0xff]
    %v51 = vld [vmem:[%s0 + $0xa4] sm:$0xf]
    %v52 = vld [vmem:[%s0 + $0xa8] sm:$0xff]
    %v53 = vld [vmem:[%s0 + $0xb0] sm:$0xff]
    %v54 = vld [vmem:[%s0 + $0xb8] sm:$0xff]
    %v55 = vld [vmem:[%s0 + $0xc0] sm:$0xf]
    %v56 = vld [vmem:[%s0 + $0xc4] sm:$0xff]
    %v57 = vld [vmem:[%s0 + $0xcc] sm:$0xff]
    %v58 = vld [vmem:[%s0 + $0xd4] sm:$0xff]
    %v59 = vld [vmem:[%s0 + $0xdc] sm:$0xf]
    %v60 = vld [vmem:[%s0 + $0xe0] sm:$0xff]
    %v61 = vld [vmem:[%s0 + $0xe8] sm:$0xff]
    %v62 = vld [vmem:[%s0 + $0xf0] sm:$0xff]
    %v63 = vld [vmem:[%s0 + $0xf8] sm:$0xf]
    %v64 = vld [vmem:[%s0 + $0xfc] sm:$0xff]
    %v65 = vld [vmem:[%s0 + $0x104] sm:$0xff]
    %v66 = vld [vmem:[%s0 + $0x10c] sm:$0xff]
    %v67 = vld [vmem:[%s0 + $0x114] sm:$0xf]
    %v68 = vld [vmem:[%s0 + $0x118] sm:$0xff]
    %v69 = vld [vmem:[%s0 + $0x120] sm:$0xff]
    %v70 = vld [vmem:[%s0 + $0x128] sm:$0xff]
    %v71 = vld [vmem:[%s0 + $0x130] sm:$0xf]
    %v72 = vld [vmem:[%s0 + $0x134] sm:$0xff]
    %v73 = vld [vmem:[%s0 + $0x13c] sm:$0xff]
    %v74 = vld [vmem:[%s0 + $0x144] sm:$0xff]
    %v75 = vld [vmem:[%s0 + $0x14c] sm:$0xf]
    %v76 = vld [vmem:[%s0 + $0x150] sm:$0xff]
    %v77 = vld [vmem:[%s0 + $0x158] sm:$0xff]
    %v78 = vld [vmem:[%s0 + $0x160] sm:$0xff]
    %v79 = vld [vmem:[%s0 + $0x168] sm:$0xf]
    %v80 = vld [vmem:[%s0 + $0x16c] sm:$0xff]
    %v81 = vld [vmem:[%s0 + $0x174] sm:$0xff]
    %v82 = vld [vmem:[%s0 + $0x17c] sm:$0xff]
    %v83 = vld [vmem:[%s0 + $0x184] sm:$0xf]
    %v84 = vld [vmem:[%s0 + $0x188] sm:$0xff]
    %v85 = vld [vmem:[%s0 + $0x190] sm:$0xff]
    %v86 = vld [vmem:[%s0 + $0x198] sm:$0xff]
    %v87 = vld [vmem:[%s0 + $0x1a0] sm:$0xf]
    %v88 = vld [vmem:[%s0 + $0x1a4] sm:$0xff]
    %v89 = vld [vmem:[%s0 + $0x1ac] sm:$0xff]
    %v90 = vld [vmem:[%s0 + $0x1b4] sm:$0xff]
    %v91 = vld [vmem:[%s0 + $0x1bc] sm:$0xf]
    %v92 = vld [vmem:[%s0 + $0x1c0] sm:$0xff]
    %v93 = vld [vmem:[%s0 + $0x1c8] sm:$0xff]
    %v94 = vld [vmem:[%s0 + $0x1d0] sm:$0xff]
    %v95 = vld [vmem:[%s0 + $0x1d8] sm:$0xf]
    %v96 = vld [vmem:[%s0 + $0x1dc] sm:$0xff]
    %v97 = vld [vmem:[%s0 + $0x1e4] sm:$0xff]
    %v98 = vld [vmem:[%s0 + $0x1ec] sm:$0xff]
    %v99 = vld [vmem:[%s0 + $0x1f4] sm:$0xf]
    %v100 = vld [vmem:[%s0 + $0x1f8] sm:$0xff]
    %v101 = vld [vmem:[%s0 + $0x200] sm:$0xff]
    %v102 = vld [vmem:[%s0 + $0x208] sm:$0xff]
    %v103 = vld [vmem:[%s0 + $0x210] sm:$0xf]
    %v104 = vld [vmem:[%s0 + $0x214] sm:$0xff]
    %v105 = vld [vmem:[%s0 + $0x21c] sm:$0xff]
    %v106 = vld [vmem:[%s0 + $0x224] sm:$0xff]
    %v107 = vld [vmem:[%s0 + $0x22c] sm:$0xf]
    %v108 = vld [vmem:[%s0 + $0x230] sm:$0xff]
    %v109 = vld [vmem:[%s0 + $0x238] sm:$0xff]
    %v110 = vld [vmem:[%s0 + $0x240] sm:$0xff]
    %v111 = vld [vmem:[%s0 + $0x248] sm:$0xf]
    %v112 = vld [vmem:[%s0 + $0x24c] sm:$0xff]
    %v113 = vld [vmem:[%s0 + $0x254] sm:$0xff]
    %v114 = vld [vmem:[%s0 + $0x25c] sm:$0xff]
    %v115 = vld [vmem:[%s0 + $0x264] sm:$0xf]
    %v116 = vld [vmem:[%s0 + $0x268] sm:$0xff]
    %v117 = vld [vmem:[%s0 + $0x270] sm:$0xff]
    %v118 = vld [vmem:[%s0 + $0x278] sm:$0xff]
    %v119 = vld [vmem:[%s0 + $0x280] sm:$0xf]
    %v120 = vld [vmem:[%s0 + $0x284] sm:$0xff]
    %v121 = vld [vmem:[%s0 + $0x28c] sm:$0xff]
    %v122 = vld [vmem:[%s0 + $0x294] sm:$0xff]
    %v123 = vld [vmem:[%s0 + $0x29c] sm:$0xf]
    %v124 = vld [vmem:[%s0 + $0x2a0] sm:$0xff]
    %v125 = vld [vmem:[%s0 + $0x2a8] sm:$0xff]
    %v126 = vld [vmem:[%s0 + $0x2b0] sm:$0xff]
    %v127 = vld [vmem:[%s0 + $0x2b8] sm:$0xf]
    %v128 = vld [vmem:[%s0 + $0x2bc] sm:$0xff]
    %v129 = vld [vmem:[%s0 + $0x2c4] sm:$0xff]
    %v130 = vld [vmem:[%s0 + $0x2cc] sm:$0xff]
    %v131 = vld [vmem:[%s0 + $0x2d4] sm:$0xf]
    %v132 = vld [vmem:[%s0 + $0x2d8] sm:$0xff]
    %v133 = vld [vmem:[%s0 + $0x2e0] sm:$0xff]
    %v134 = vld [vmem:[%s0 + $0x2e8] sm:$0xff]
    %v135 = vld [vmem:[%s0 + $0x2f0] sm:$0xf]
    %v136 = vld [vmem:[%s0 + $0x2f4] sm:$0xff]
    %v137 = vld [vmem:[%s0 + $0x2fc] sm:$0xff]
    %v138 = vld [vmem:[%s0 + $0x304] sm:$0xff]
    %v139 = vld [vmem:[%s0 + $0x30c] sm:$0xf]
    %v140 = vld [vmem:[%s0 + $0x310] sm:$0xff]
    %v141 = vld [vmem:[%s0 + $0x318] sm:$0xff]
    %v142 = vld [vmem:[%s0 + $0x320] sm:$0xff]
    %v143 = vld [vmem:[%s0 + $0x328] sm:$0xf]
    %v144 = vld [vmem:[%s0 + $0x32c] sm:$0xff]
    %v145 = vld [vmem:[%s0 + $0x334] sm:$0xff]
    %v146 = vld [vmem:[%s0 + $0x33c] sm:$0xff]
    %v147 = vld [vmem:[%s0 + $0x344] sm:$0xf]
    %v148 = vld [vmem:[%s0 + $0x348] sm:$0xff]
    %v149 = vld [vmem:[%s0 + $0x350] sm:$0xff]
    %v150 = vld [vmem:[%s0 + $0x358] sm:$0xff]
    %v151 = vld [vmem:[%s0 + $0x360] sm:$0xf]
    %v152 = vld [vmem:[%s0 + $0x364] sm:$0xff]
    %v153 = vld [vmem:[%s0 + $0x36c] sm:$0xff]
    %v154 = vld [vmem:[%s0 + $0x374] sm:$0xff]
    %v155 = vld [vmem:[%s0 + $0x37c] sm:$0xf]
    %v156 = vld [vmem:[%s1] sm:$0xff]
    %v157 = vld [vmem:[%s1 + $0x8] sm:$0xff]
    %v158 = vld [vmem:[%s1 + $0x10] sm:$0xff]
    %v159 = vld [vmem:[%s1 + $0x18] sm:$0xff]
    %v160 = vld [vmem:[%s1 + $0x20] sm:$0xff]
    %v161 = vld [vmem:[%s1 + $0x28] sm:$0xff]
    %v162 = vld [vmem:[%s1 + $0x30] sm:$0xff]
    %v163 = vld [vmem:[%s1 + $0x38] sm:$0xff]
    %v164 = vld [vmem:[%s1 + $0x40] sm:$0xff]
    %v165 = vld [vmem:[%s1 + $0x48] sm:$0xff]
    %v166 = vld [vmem:[%s1 + $0x50] sm:$0xff]
    %v167 = vld [vmem:[%s1 + $0x58] sm:$0xff]
    %v168 = vld [vmem:[%s1 + $0x60] sm:$0xff]
    %v169 = vld [vmem:[%s1 + $0x68] sm:$0xff]
    %v170 = vld [vmem:[%s1 + $0x70] sm:$0xff]
    %v171 = vld [vmem:[%s1 + $0x78] sm:$0xff]
    %v172 = vld [vmem:[%s1 + $0x80] sm:$0xff]
    %v173 = vld [vmem:[%s1 + $0x88] sm:$0xff]
    %v174 = vld [vmem:[%s1 + $0x90] sm:$0xff]
    %v175 = vld [vmem:[%s1 + $0x98] sm:$0xff]
    %v176 = vld [vmem:[%s1 + $0xa0] sm:$0xff]
    %v177 = vld [vmem:[%s1 + $0xa8] sm:$0xff]
    %v178 = vld [vmem:[%s1 + $0xb0] sm:$0xff]
    %v179 = vld [vmem:[%s1 + $0xb8] sm:$0xff]
    %v180 = vld [vmem:[%s1 + $0xc0] sm:$0xff]
    %v181 = vld [vmem:[%s1 + $0xc8] sm:$0xff]
    %v182 = vld [vmem:[%s1 + $0xd0] sm:$0xff]
    %v183 = vld [vmem:[%s1 + $0xd8] sm:$0xff]
    %v184 = vld [vmem:[%s1 + $0xe0] sm:$0xff]
    %v185 = vld [vmem:[%s1 + $0xe8] sm:$0xff]
    %v186 = vld [vmem:[%s1 + $0xf0] sm:$0xff]
    %v187 = vld [vmem:[%s1 + $0xf8] sm:$0xff]
    %v188 = vld [vmem:[%s1 + $0x100] sm:$0xff]
    %v189 = vld [vmem:[%s1 + $0x108] sm:$0xff]
    %v190 = vld [vmem:[%s1 + $0x110] sm:$0xff]
    %v191 = vld [vmem:[%s1 + $0x118] sm:$0xff]
    %v192 = vld [vmem:[%s1 + $0x120] sm:$0xff]
    %v193 = vld [vmem:[%s1 + $0x128] sm:$0xff]
    %v194 = vld [vmem:[%s1 + $0x130] sm:$0xff]
    %v195 = vld [vmem:[%s1 + $0x138] sm:$0xff]
    %v196 = vld [vmem:[%s1 + $0x140] sm:$0xff]
    %v197 = vld [vmem:[%s1 + $0x148] sm:$0xff]
    %v198 = vld [vmem:[%s1 + $0x150] sm:$0xff]
    %v199 = vld [vmem:[%s1 + $0x158] sm:$0xff]
    %v200 = vld [vmem:[%s1 + $0x160] sm:$0xff]
    %v201 = vld [vmem:[%s1 + $0x168] sm:$0xff]
    %v202 = vld [vmem:[%s1 + $0x170] sm:$0xff]
    %v203 = vld [vmem:[%s1 + $0x178] sm:$0xff]
    %v204 = vld [vmem:[%s1 + $0x180] sm:$0xff]
    %v205 = vld [vmem:[%s1 + $0x188] sm:$0xff]
    %v206 = vld [vmem:[%s1 + $0x190] sm:$0xff]
    %v207 = vld [vmem:[%s1 + $0x198] sm:$0xff]
    %v208 = vld [vmem:[%s1 + $0x1a0] sm:$0xff]
    %v209 = vld [vmem:[%s1 + $0x1a8] sm:$0xff]
    %v210 = vld [vmem:[%s1 + $0x1b0] sm:$0xff]
    %v211 = vld [vmem:[%s1 + $0x1b8] sm:$0xff]
    %v212 = vld [vmem:[%s1 + $0x1c0] sm:$0xff]
    %v213 = vld [vmem:[%s1 + $0x1c8] sm:$0xff]
    %v214 = vld [vmem:[%s1 + $0x1d0] sm:$0xff]
    %v215 = vld [vmem:[%s1 + $0x1d8] sm:$0xff]
    %v216 = vld [vmem:[%s1 + $0x1e0] sm:$0xff]
    %v217 = vld [vmem:[%s1 + $0x1e8] sm:$0xff]
    %v218 = vld [vmem:[%s1 + $0x1f0] sm:$0xff]
    %v219 = vld [vmem:[%s1 + $0x1f8] sm:$0xff]
    %v220 = vld [vmem:[%s1 + $0x200] sm:$0xff]
    %v221 = vld [vmem:[%s1 + $0x208] sm:$0xff]
    %v222 = vld [vmem:[%s1 + $0x210] sm:$0xff]
    %v223 = vld [vmem:[%s1 + $0x218] sm:$0xff]
    %v224 = vld [vmem:[%s1 + $0x220] sm:$0xff]
    %v225 = vld [vmem:[%s1 + $0x228] sm:$0xff]
    %v226 = vld [vmem:[%s1 + $0x230] sm:$0xff]
    %v227 = vld [vmem:[%s1 + $0x238] sm:$0xff]
    %v228 = vld [vmem:[%s1 + $0x240] sm:$0xff]
    %v229 = vld [vmem:[%s1 + $0x248] sm:$0xff]
    %v230 = vld [vmem:[%s1 + $0x250] sm:$0xff]
    %v231 = vld [vmem:[%s1 + $0x258] sm:$0xff]
    %v232 = vld [vmem:[%s1 + $0x260] sm:$0xff]
    %v233 = vld [vmem:[%s1 + $0x268] sm:$0xff]
    %v234 = vld [vmem:[%s1 + $0x270] sm:$0xff]
    %v235 = vld [vmem:[%s1 + $0x278] sm:$0xff]
    %v236 = vld [vmem:[%s1 + $0x280] sm:$0xff]
    %v237 = vld [vmem:[%s1 + $0x288] sm:$0xff]
    %v238 = vld [vmem:[%s1 + $0x290] sm:$0xff]
    %v239 = vld [vmem:[%s1 + $0x298] sm:$0xff]
    %v240 = vld [vmem:[%s1 + $0x2a0] sm:$0xff]
    %v241 = vld [vmem:[%s1 + $0x2a8] sm:$0xff]
    %v242 = vld [vmem:[%s1 + $0x2b0] sm:$0xff]
    %v243 = vld [vmem:[%s1 + $0x2b8] sm:$0xff]
    %v244 = vld [vmem:[%s1 + $0x2c0] sm:$0xff]
    %v245 = vld [vmem:[%s1 + $0x2c8] sm:$0xff]
    %v246 = vld [vmem:[%s1 + $0x2d0] sm:$0xff]
    %v247 = vld [vmem:[%s1 + $0x2d8] sm:$0xff]
    %v248 = vld [vmem:[%s1 + $0x2e0] sm:$0xff]
    %v249 = vld [vmem:[%s1 + $0x2e8] sm:$0xff]
    %v250 = vld [vmem:[%s1 + $0x2f0] sm:$0xff]
    %v251 = vld [vmem:[%s1 + $0x2f8] sm:$0xff]
    %v252 = vld [vmem:[%s1 + $0x300] sm:$0xff]
    %v253 = vld [vmem:[%s1 + $0x308] sm:$0xff]
    %v254 = vld [vmem:[%s2] sm:$0x3]
    %v256 = vlaneseq
    %v257 = vshrl.u32 %v256, 7
    %v258 = vsub.s32 0, %v257
    %v259 = vrot.slane %v254, %v258
    %v260 = vlaneseq
    %v261 = vshrl.u32 %v260, 7
    %v262 = vsub.s32 1, %v261
    %v263 = vrot.slane %v254, %v262
    %v394 = vunpack.c.l.b16 %v28
    %v395 = vunpack.c.h.b16 %v28
    %v396 = vunpack.c.l.b16 %v29
    %v397 = vunpack.c.h.b16 %v29
    %v398 = vunpack.c.l.b16 %v30
    %v399 = vunpack.c.h.b16 %v30
    %v400 = vunpack.c.l.b16 %v31
    %v401 = vunpack.c.l.b16 %v32
    %v402 = vunpack.c.h.b16 %v32
    %v403 = vunpack.c.l.b16 %v33
    %v404 = vunpack.c.h.b16 %v33
    %v405 = vunpack.c.l.b16 %v34
    %v406 = vunpack.c.h.b16 %v34
    %v407 = vunpack.c.l.b16 %v35
    %v408 = vunpack.c.l.b16 %v36
    %v409 = vunpack.c.h.b16 %v36
    %v410 = vunpack.c.l.b16 %v37
    %v411 = vunpack.c.h.b16 %v37
    %v412 = vunpack.c.l.b16 %v38
    %v413 = vunpack.c.h.b16 %v38
    %v414 = vunpack.c.l.b16 %v39
    %v415 = vunpack.c.l.b16 %v40
    %v416 = vunpack.c.h.b16 %v40
    %v417 = vunpack.c.l.b16 %v41
    %v418 = vunpack.c.h.b16 %v41
    %v419 = vunpack.c.l.b16 %v42
    %v420 = vunpack.c.h.b16 %v42
    %v421 = vunpack.c.l.b16 %v43
    %v422 = vunpack.c.l.b16 %v44
    %v423 = vunpack.c.h.b16 %v44
    %v424 = vunpack.c.l.b16 %v45
    %v425 = vunpack.c.h.b16 %v45
    %v426 = vunpack.c.l.b16 %v46
    %v427 = vunpack.c.h.b16 %v46
    %v428 = vunpack.c.l.b16 %v47
    %v429 = vunpack.c.l.b16 %v48
    %v430 = vunpack.c.h.b16 %v48
    %v431 = vunpack.c.l.b16 %v49
    %v432 = vunpack.c.h.b16 %v49
    %v433 = vunpack.c.l.b16 %v50
    %v434 = vunpack.c.h.b16 %v50
    %v435 = vunpack.c.l.b16 %v51
    %v436 = vunpack.c.l.b16 %v52
    %v437 = vunpack.c.h.b16 %v52
    %v438 = vunpack.c.l.b16 %v53
    %v439 = vunpack.c.h.b16 %v53
    %v440 = vunpack.c.l.b16 %v54
    %v441 = vunpack.c.h.b16 %v54
    %v442 = vunpack.c.l.b16 %v55
    %v443 = vunpack.c.l.b16 %v56
    %v444 = vunpack.c.h.b16 %v56
    %v445 = vunpack.c.l.b16 %v57
    %v446 = vunpack.c.h.b16 %v57
    %v447 = vunpack.c.l.b16 %v58
    %v448 = vunpack.c.h.b16 %v58
    %v449 = vunpack.c.l.b16 %v59
    %v450 = vunpack.c.l.b16 %v60
    %v451 = vunpack.c.h.b16 %v60
    %v452 = vunpack.c.l.b16 %v61
    %v453 = vunpack.c.h.b16 %v61
    %v454 = vunpack.c.l.b16 %v62
    %v455 = vunpack.c.h.b16 %v62
    %v456 = vunpack.c.l.b16 %v63
    %v457 = vunpack.c.l.b16 %v64
    %v458 = vunpack.c.h.b16 %v64
    %v459 = vunpack.c.l.b16 %v65
    %v460 = vunpack.c.h.b16 %v65
    %v461 = vunpack.c.l.b16 %v66
    %v462 = vunpack.c.h.b16 %v66
    %v463 = vunpack.c.l.b16 %v67
    %v464 = vunpack.c.l.b16 %v68
    %v465 = vunpack.c.h.b16 %v68
    %v466 = vunpack.c.l.b16 %v69
    %v467 = vunpack.c.h.b16 %v69
    %v468 = vunpack.c.l.b16 %v70
    %v469 = vunpack.c.h.b16 %v70
    %v470 = vunpack.c.l.b16 %v71
    %v471 = vunpack.c.l.b16 %v72
    %v472 = vunpack.c.h.b16 %v72
    %v473 = vunpack.c.l.b16 %v73
    %v474 = vunpack.c.h.b16 %v73
    %v475 = vunpack.c.l.b16 %v74
    %v476 = vunpack.c.h.b16 %v74
    %v477 = vunpack.c.l.b16 %v75
    %v478 = vunpack.c.l.b16 %v76
    %v479 = vunpack.c.h.b16 %v76
    %v480 = vunpack.c.l.b16 %v77
    %v481 = vunpack.c.h.b16 %v77
    %v482 = vunpack.c.l.b16 %v78
    %v483 = vunpack.c.h.b16 %v78
    %v484 = vunpack.c.l.b16 %v79
    %v485 = vunpack.c.l.b16 %v80
    %v486 = vunpack.c.h.b16 %v80
    %v487 = vunpack.c.l.b16 %v81
    %v488 = vunpack.c.h.b16 %v81
    %v489 = vunpack.c.l.b16 %v82
    %v490 = vunpack.c.h.b16 %v82
    %v491 = vunpack.c.l.b16 %v83
    %v492 = vunpack.c.l.b16 %v84
    %v493 = vunpack.c.h.b16 %v84
    %v494 = vunpack.c.l.b16 %v85
    %v495 = vunpack.c.h.b16 %v85
    %v496 = vunpack.c.l.b16 %v86
    %v497 = vunpack.c.h.b16 %v86
    %v498 = vunpack.c.l.b16 %v87
    %v499 = vunpack.c.l.b16 %v88
    %v500 = vunpack.c.h.b16 %v88
    %v501 = vunpack.c.l.b16 %v89
    %v502 = vunpack.c.h.b16 %v89
    %v503 = vunpack.c.l.b16 %v90
    %v504 = vunpack.c.h.b16 %v90
    %v505 = vunpack.c.l.b16 %v91
    %v506 = vunpack.c.l.b16 %v92
    %v507 = vunpack.c.h.b16 %v92
    %v508 = vunpack.c.l.b16 %v93
    %v509 = vunpack.c.h.b16 %v93
    %v510 = vunpack.c.l.b16 %v94
    %v511 = vunpack.c.h.b16 %v94
    %v512 = vunpack.c.l.b16 %v95
    %v513 = vunpack.c.l.b16 %v96
    %v514 = vunpack.c.h.b16 %v96
    %v515 = vunpack.c.l.b16 %v97
    %v516 = vunpack.c.h.b16 %v97
    %v517 = vunpack.c.l.b16 %v98
    %v518 = vunpack.c.h.b16 %v98
    %v519 = vunpack.c.l.b16 %v99
    %v520 = vunpack.c.l.b16 %v100
    %v521 = vunpack.c.h.b16 %v100
    %v522 = vunpack.c.l.b16 %v101
    %v523 = vunpack.c.h.b16 %v101
    %v524 = vunpack.c.l.b16 %v102
    %v525 = vunpack.c.h.b16 %v102
    %v526 = vunpack.c.l.b16 %v103
    %v527 = vunpack.c.l.b16 %v104
    %v528 = vunpack.c.h.b16 %v104
    %v529 = vunpack.c.l.b16 %v105
    %v530 = vunpack.c.h.b16 %v105
    %v531 = vunpack.c.l.b16 %v106
    %v532 = vunpack.c.h.b16 %v106
    %v533 = vunpack.c.l.b16 %v107
    %v534 = vunpack.c.l.b16 %v108
    %v535 = vunpack.c.h.b16 %v108
    %v536 = vunpack.c.l.b16 %v109
    %v537 = vunpack.c.h.b16 %v109
    %v538 = vunpack.c.l.b16 %v110
    %v539 = vunpack.c.h.b16 %v110
    %v540 = vunpack.c.l.b16 %v111
    %v541 = vunpack.c.l.b16 %v112
    %v542 = vunpack.c.h.b16 %v112
    %v543 = vunpack.c.l.b16 %v113
    %v544 = vunpack.c.h.b16 %v113
    %v545 = vunpack.c.l.b16 %v114
    %v546 = vunpack.c.h.b16 %v114
    %v547 = vunpack.c.l.b16 %v115
    %v548 = vunpack.c.l.b16 %v116
    %v549 = vunpack.c.h.b16 %v116
    %v550 = vunpack.c.l.b16 %v117
    %v551 = vunpack.c.h.b16 %v117
    %v552 = vunpack.c.l.b16 %v118
    %v553 = vunpack.c.h.b16 %v118
    %v554 = vunpack.c.l.b16 %v119
    %v555 = vunpack.c.l.b16 %v120
    %v556 = vunpack.c.h.b16 %v120
    %v557 = vunpack.c.l.b16 %v121
    %v558 = vunpack.c.h.b16 %v121
    %v559 = vunpack.c.l.b16 %v122
    %v560 = vunpack.c.h.b16 %v122
    %v561 = vunpack.c.l.b16 %v123
    %v562 = vunpack.c.l.b16 %v124
    %v563 = vunpack.c.h.b16 %v124
    %v564 = vunpack.c.l.b16 %v125
    %v565 = vunpack.c.h.b16 %v125
    %v566 = vunpack.c.l.b16 %v126
    %v567 = vunpack.c.h.b16 %v126
    %v568 = vunpack.c.l.b16 %v127
    %v569 = vunpack.c.l.b16 %v128
    %v570 = vunpack.c.h.b16 %v128
    %v571 = vunpack.c.l.b16 %v129
    %v572 = vunpack.c.h.b16 %v129
    %v573 = vunpack.c.l.b16 %v130
    %v574 = vunpack.c.h.b16 %v130
    %v575 = vunpack.c.l.b16 %v131
    %v576 = vunpack.c.l.b16 %v132
    %v577 = vunpack.c.h.b16 %v132
    %v578 = vunpack.c.l.b16 %v133
    %v579 = vunpack.c.h.b16 %v133
    %v580 = vunpack.c.l.b16 %v134
    %v581 = vunpack.c.h.b16 %v134
    %v582 = vunpack.c.l.b16 %v135
    %v583 = vunpack.c.l.b16 %v136
    %v584 = vunpack.c.h.b16 %v136
    %v585 = vunpack.c.l.b16 %v137
    %v586 = vunpack.c.h.b16 %v137
    %v587 = vunpack.c.l.b16 %v138
    %v588 = vunpack.c.h.b16 %v138
    %v589 = vunpack.c.l.b16 %v139
    %v590 = vunpack.c.l.b16 %v140
    %v591 = vunpack.c.h.b16 %v140
    %v592 = vunpack.c.l.b16 %v141
    %v593 = vunpack.c.h.b16 %v141
    %v594 = vunpack.c.l.b16 %v142
    %v595 = vunpack.c.h.b16 %v142
    %v596 = vunpack.c.l.b16 %v143
    %v597 = vunpack.c.l.b16 %v144
    %v598 = vunpack.c.h.b16 %v144
    %v599 = vunpack.c.l.b16 %v145
    %v600 = vunpack.c.h.b16 %v145
    %v601 = vunpack.c.l.b16 %v146
    %v602 = vunpack.c.h.b16 %v146
    %v603 = vunpack.c.l.b16 %v147
    %v604 = vunpack.c.l.b16 %v148
    %v605 = vunpack.c.h.b16 %v148
    %v606 = vunpack.c.l.b16 %v149
    %v607 = vunpack.c.h.b16 %v149
    %v608 = vunpack.c.l.b16 %v150
    %v609 = vunpack.c.h.b16 %v150
    %v610 = vunpack.c.l.b16 %v151
    %v611 = vunpack.c.l.b16 %v152
    %v612 = vunpack.c.h.b16 %v152
    %v613 = vunpack.c.l.b16 %v153
    %v614 = vunpack.c.h.b16 %v153
    %v615 = vunpack.c.l.b16 %v154
    %v616 = vunpack.c.h.b16 %v154
    %v617 = vunpack.c.l.b16 %v155
    %v618 = vpack.c.b16 %v401, %v394
    %v619 = vpack.c.b16 %v402, %v395
    %v620 = vpack.c.b16 %v403, %v396
    %v621 = vpack.c.b16 %v404, %v397
    %v622 = vpack.c.b16 %v405, %v398
    %v623 = vpack.c.b16 %v406, %v399
    %v624 = vpack.c.b16 %v407, %v400
    %v625 = vpack.c.b16 %v415, %v408
    %v626 = vpack.c.b16 %v416, %v409
    %v627 = vpack.c.b16 %v417, %v410
    %v628 = vpack.c.b16 %v418, %v411
    %v629 = vpack.c.b16 %v419, %v412
    %v630 = vpack.c.b16 %v420, %v413
    %v631 = vpack.c.b16 %v421, %v414
    %v632 = vpack.c.b16 %v429, %v422
    %v633 = vpack.c.b16 %v430, %v423
    %v634 = vpack.c.b16 %v431, %v424
    %v635 = vpack.c.b16 %v432, %v425
    %v636 = vpack.c.b16 %v433, %v426
    %v637 = vpack.c.b16 %v434, %v427
    %v638 = vpack.c.b16 %v435, %v428
    %v639 = vpack.c.b16 %v443, %v436
    %v640 = vpack.c.b16 %v444, %v437
    %v641 = vpack.c.b16 %v445, %v438
    %v642 = vpack.c.b16 %v446, %v439
    %v643 = vpack.c.b16 %v447, %v440
    %v644 = vpack.c.b16 %v448, %v441
    %v645 = vpack.c.b16 %v449, %v442
    %v646 = vpack.c.b16 %v457, %v450
    %v647 = vpack.c.b16 %v458, %v451
    %v648 = vpack.c.b16 %v459, %v452
    %v649 = vpack.c.b16 %v460, %v453
    %v650 = vpack.c.b16 %v461, %v454
    %v651 = vpack.c.b16 %v462, %v455
    %v652 = vpack.c.b16 %v463, %v456
    %v653 = vpack.c.b16 %v471, %v464
    %v654 = vpack.c.b16 %v472, %v465
    %v655 = vpack.c.b16 %v473, %v466
    %v656 = vpack.c.b16 %v474, %v467
    %v657 = vpack.c.b16 %v475, %v468
    %v658 = vpack.c.b16 %v476, %v469
    %v659 = vpack.c.b16 %v477, %v470
    %v660 = vpack.c.b16 %v485, %v478
    %v661 = vpack.c.b16 %v486, %v479
    %v662 = vpack.c.b16 %v487, %v480
    %v663 = vpack.c.b16 %v488, %v481
    %v664 = vpack.c.b16 %v489, %v482
    %v665 = vpack.c.b16 %v490, %v483
    %v666 = vpack.c.b16 %v491, %v484
    %v667 = vpack.c.b16 %v499, %v492
    %v668 = vpack.c.b16 %v500, %v493
    %v669 = vpack.c.b16 %v501, %v494
    %v670 = vpack.c.b16 %v502, %v495
    %v671 = vpack.c.b16 %v503, %v496
    %v672 = vpack.c.b16 %v504, %v497
    %v673 = vpack.c.b16 %v505, %v498
    %v674 = vpack.c.b16 %v513, %v506
    %v675 = vpack.c.b16 %v514, %v507
    %v676 = vpack.c.b16 %v515, %v508
    %v677 = vpack.c.b16 %v516, %v509
    %v678 = vpack.c.b16 %v517, %v510
    %v679 = vpack.c.b16 %v518, %v511
    %v680 = vpack.c.b16 %v519, %v512
    %v681 = vpack.c.b16 %v527, %v520
    %v682 = vpack.c.b16 %v528, %v521
    %v683 = vpack.c.b16 %v529, %v522
    %v684 = vpack.c.b16 %v530, %v523
    %v685 = vpack.c.b16 %v531, %v524
    %v686 = vpack.c.b16 %v532, %v525
    %v687 = vpack.c.b16 %v533, %v526
    %v688 = vpack.c.b16 %v541, %v534
    %v689 = vpack.c.b16 %v542, %v535
    %v690 = vpack.c.b16 %v543, %v536
    %v691 = vpack.c.b16 %v544, %v537
    %v692 = vpack.c.b16 %v545, %v538
    %v693 = vpack.c.b16 %v546, %v539
    %v694 = vpack.c.b16 %v547, %v540
    %v695 = vpack.c.b16 %v555, %v548
    %v696 = vpack.c.b16 %v556, %v549
    %v697 = vpack.c.b16 %v557, %v550
    %v698 = vpack.c.b16 %v558, %v551
    %v699 = vpack.c.b16 %v559, %v552
    %v700 = vpack.c.b16 %v560, %v553
    %v701 = vpack.c.b16 %v561, %v554
    %v702 = vpack.c.b16 %v569, %v562
    %v703 = vpack.c.b16 %v570, %v563
    %v704 = vpack.c.b16 %v571, %v564
    %v705 = vpack.c.b16 %v572, %v565
    %v706 = vpack.c.b16 %v573, %v566
    %v707 = vpack.c.b16 %v574, %v567
    %v708 = vpack.c.b16 %v575, %v568
    %v709 = vpack.c.b16 %v583, %v576
    %v710 = vpack.c.b16 %v584, %v577
    %v711 = vpack.c.b16 %v585, %v578
    %v712 = vpack.c.b16 %v586, %v579
    %v713 = vpack.c.b16 %v587, %v580
    %v714 = vpack.c.b16 %v588, %v581
    %v715 = vpack.c.b16 %v589, %v582
    %v716 = vpack.c.b16 %v597, %v590
    %v717 = vpack.c.b16 %v598, %v591
    %v718 = vpack.c.b16 %v599, %v592
    %v719 = vpack.c.b16 %v600, %v593
    %v720 = vpack.c.b16 %v601, %v594
    %v721 = vpack.c.b16 %v602, %v595
    %v722 = vpack.c.b16 %v603, %v596
    %v723 = vpack.c.b16 %v611, %v604
    %v724 = vpack.c.b16 %v612, %v605
    %v725 = vpack.c.b16 %v613, %v606
    %v726 = vpack.c.b16 %v614, %v607
    %v727 = vpack.c.b16 %v615, %v608
    %v728 = vpack.c.b16 %v616, %v609
    %v729 = vpack.c.b16 %v617, %v610
    %v924 = vunpack.c.l.b16 %v156
    %v925 = vunpack.c.h.b16 %v156
    %v926 = vunpack.c.l.b16 %v157
    %v927 = vunpack.c.h.b16 %v157
    %v928 = vunpack.c.l.b16 %v158
    %v929 = vunpack.c.h.b16 %v158
    %v930 = vunpack.c.l.b16 %v159
    %v931 = vunpack.c.h.b16 %v159
    %v932 = vunpack.c.l.b16 %v160
    %v933 = vunpack.c.h.b16 %v160
    %v934 = vunpack.c.l.b16 %v161
    %v935 = vunpack.c.h.b16 %v161
    %v936 = vunpack.c.l.b16 %v162
    %v937 = vunpack.c.h.b16 %v162
    %v938 = vunpack.c.l.b16 %v163
    %v939 = vunpack.c.h.b16 %v163
    %v940 = vunpack.c.l.b16 %v164
    %v941 = vunpack.c.h.b16 %v164
    %v942 = vunpack.c.l.b16 %v165
    %v943 = vunpack.c.h.b16 %v165
    %v944 = vunpack.c.l.b16 %v166
    %v945 = vunpack.c.h.b16 %v166
    %v946 = vunpack.c.l.b16 %v167
    %v947 = vunpack.c.h.b16 %v167
    %v948 = vunpack.c.l.b16 %v168
    %v949 = vunpack.c.h.b16 %v168
    %v950 = vunpack.c.l.b16 %v169
    %v951 = vunpack.c.h.b16 %v169
    %v952 = vunpack.c.l.b16 %v170
    %v953 = vunpack.c.h.b16 %v170
    %v954 = vunpack.c.l.b16 %v171
    %v955 = vunpack.c.h.b16 %v171
    %v956 = vunpack.c.l.b16 %v172
    %v957 = vunpack.c.h.b16 %v172
    %v958 = vunpack.c.l.b16 %v173
    %v959 = vunpack.c.h.b16 %v173
    %v960 = vunpack.c.l.b16 %v174
    %v961 = vunpack.c.h.b16 %v174
    %v962 = vunpack.c.l.b16 %v175
    %v963 = vunpack.c.h.b16 %v175
    %v964 = vunpack.c.l.b16 %v176
    %v965 = vunpack.c.h.b16 %v176
    %v966 = vunpack.c.l.b16 %v177
    %v967 = vunpack.c.h.b16 %v177
    %v968 = vunpack.c.l.b16 %v178
    %v969 = vunpack.c.h.b16 %v178
    %v970 = vunpack.c.l.b16 %v179
    %v971 = vunpack.c.h.b16 %v179
    %v972 = vunpack.c.l.b16 %v180
    %v973 = vunpack.c.h.b16 %v180
    %v974 = vunpack.c.l.b16 %v181
    %v975 = vunpack.c.h.b16 %v181
    %v976 = vunpack.c.l.b16 %v182
    %v977 = vunpack.c.h.b16 %v182
    %v978 = vunpack.c.l.b16 %v183
    %v979 = vunpack.c.h.b16 %v183
    %v980 = vunpack.c.l.b16 %v184
    %v981 = vunpack.c.h.b16 %v184
    %v982 = vunpack.c.l.b16 %v185
    %v983 = vunpack.c.h.b16 %v185
    %v984 = vunpack.c.l.b16 %v186
    %v985 = vunpack.c.h.b16 %v186
    %v986 = vunpack.c.l.b16 %v187
    %v987 = vunpack.c.h.b16 %v187
    %v988 = vunpack.c.l.b16 %v188
    %v989 = vunpack.c.h.b16 %v188
    %v990 = vunpack.c.l.b16 %v189
    %v991 = vunpack.c.h.b16 %v189
    %v992 = vunpack.c.l.b16 %v190
    %v993 = vunpack.c.h.b16 %v190
    %v994 = vunpack.c.l.b16 %v191
    %v995 = vunpack.c.h.b16 %v191
    %v996 = vunpack.c.l.b16 %v192
    %v997 = vunpack.c.h.b16 %v192
    %v998 = vunpack.c.l.b16 %v193
    %v999 = vunpack.c.h.b16 %v193
    %v1000 = vunpack.c.l.b16 %v194
    %v1001 = vunpack.c.h.b16 %v194
    %v1002 = vunpack.c.l.b16 %v195
    %v1003 = vunpack.c.h.b16 %v195
    %v1004 = vunpack.c.l.b16 %v196
    %v1005 = vunpack.c.h.b16 %v196
    %v1006 = vunpack.c.l.b16 %v197
    %v1007 = vunpack.c.h.b16 %v197
    %v1008 = vunpack.c.l.b16 %v198
    %v1009 = vunpack.c.h.b16 %v198
    %v1010 = vunpack.c.l.b16 %v199
    %v1011 = vunpack.c.h.b16 %v199
    %v1012 = vunpack.c.l.b16 %v200
    %v1013 = vunpack.c.h.b16 %v200
    %v1014 = vunpack.c.l.b16 %v201
    %v1015 = vunpack.c.h.b16 %v201
    %v1016 = vunpack.c.l.b16 %v202
    %v1017 = vunpack.c.h.b16 %v202
    %v1018 = vunpack.c.l.b16 %v203
    %v1019 = vunpack.c.h.b16 %v203
    %v1020 = vunpack.c.l.b16 %v204
    %v1021 = vunpack.c.h.b16 %v204
    %v1022 = vunpack.c.l.b16 %v205
    %v1023 = vunpack.c.h.b16 %v205
    %v1024 = vunpack.c.l.b16 %v206
    %v1025 = vunpack.c.h.b16 %v206
    %v1026 = vunpack.c.l.b16 %v207
    %v1027 = vunpack.c.h.b16 %v207
    %v1028 = vunpack.c.l.b16 %v208
    %v1029 = vunpack.c.h.b16 %v208
    %v1030 = vunpack.c.l.b16 %v209
    %v1031 = vunpack.c.h.b16 %v209
    %v1032 = vunpack.c.l.b16 %v210
    %v1033 = vunpack.c.h.b16 %v210
    %v1034 = vunpack.c.l.b16 %v211
    %v1035 = vunpack.c.h.b16 %v211
    %v1036 = vunpack.c.l.b16 %v212
    %v1037 = vunpack.c.h.b16 %v212
    %v1038 = vunpack.c.l.b16 %v213
    %v1039 = vunpack.c.h.b16 %v213
    %v1040 = vunpack.c.l.b16 %v214
    %v1041 = vunpack.c.h.b16 %v214
    %v1042 = vunpack.c.l.b16 %v215
    %v1043 = vunpack.c.h.b16 %v215
    %v1044 = vunpack.c.l.b16 %v216
    %v1045 = vunpack.c.h.b16 %v216
    %v1046 = vunpack.c.l.b16 %v217
    %v1047 = vunpack.c.h.b16 %v217
    %v1048 = vunpack.c.l.b16 %v218
    %v1049 = vunpack.c.h.b16 %v218
    %v1050 = vunpack.c.l.b16 %v219
    %v1051 = vunpack.c.h.b16 %v219
    %v1052 = vunpack.c.l.b16 %v220
    %v1053 = vunpack.c.h.b16 %v220
    %v1054 = vunpack.c.l.b16 %v221
    %v1055 = vunpack.c.h.b16 %v221
    %v1056 = vunpack.c.l.b16 %v222
    %v1057 = vunpack.c.h.b16 %v222
    %v1058 = vunpack.c.l.b16 %v223
    %v1059 = vunpack.c.h.b16 %v223
    %v1060 = vunpack.c.l.b16 %v224
    %v1061 = vunpack.c.h.b16 %v224
    %v1062 = vunpack.c.l.b16 %v225
    %v1063 = vunpack.c.h.b16 %v225
    %v1064 = vunpack.c.l.b16 %v226
    %v1065 = vunpack.c.h.b16 %v226
    %v1066 = vunpack.c.l.b16 %v227
    %v1067 = vunpack.c.h.b16 %v227
    %v1068 = vunpack.c.l.b16 %v228
    %v1069 = vunpack.c.h.b16 %v228
    %v1070 = vunpack.c.l.b16 %v229
    %v1071 = vunpack.c.h.b16 %v229
    %v1072 = vunpack.c.l.b16 %v230
    %v1073 = vunpack.c.h.b16 %v230
    %v1074 = vunpack.c.l.b16 %v231
    %v1075 = vunpack.c.h.b16 %v231
    %v1076 = vunpack.c.l.b16 %v232
    %v1077 = vunpack.c.h.b16 %v232
    %v1078 = vunpack.c.l.b16 %v233
    %v1079 = vunpack.c.h.b16 %v233
    %v1080 = vunpack.c.l.b16 %v234
    %v1081 = vunpack.c.h.b16 %v234
    %v1082 = vunpack.c.l.b16 %v235
    %v1083 = vunpack.c.h.b16 %v235
    %v1084 = vunpack.c.l.b16 %v236
    %v1085 = vunpack.c.h.b16 %v236
    %v1086 = vunpack.c.l.b16 %v237
    %v1087 = vunpack.c.h.b16 %v237
    %v1088 = vunpack.c.l.b16 %v238
    %v1089 = vunpack.c.h.b16 %v238
    %v1090 = vunpack.c.l.b16 %v239
    %v1091 = vunpack.c.h.b16 %v239
    %v1092 = vunpack.c.l.b16 %v240
    %v1093 = vunpack.c.h.b16 %v240
    %v1094 = vunpack.c.l.b16 %v241
    %v1095 = vunpack.c.h.b16 %v241
    %v1096 = vunpack.c.l.b16 %v242
    %v1097 = vunpack.c.h.b16 %v242
    %v1098 = vunpack.c.l.b16 %v243
    %v1099 = vunpack.c.h.b16 %v243
    %v1100 = vunpack.c.l.b16 %v244
    %v1101 = vunpack.c.h.b16 %v244
    %v1102 = vunpack.c.l.b16 %v245
    %v1103 = vunpack.c.h.b16 %v245
    %v1104 = vunpack.c.l.b16 %v246
    %v1105 = vunpack.c.h.b16 %v246
    %v1106 = vunpack.c.l.b16 %v247
    %v1107 = vunpack.c.h.b16 %v247
    %v1108 = vunpack.c.l.b16 %v248
    %v1109 = vunpack.c.h.b16 %v248
    %v1110 = vunpack.c.l.b16 %v249
    %v1111 = vunpack.c.h.b16 %v249
    %v1112 = vunpack.c.l.b16 %v250
    %v1113 = vunpack.c.h.b16 %v250
    %v1114 = vunpack.c.l.b16 %v251
    %v1115 = vunpack.c.h.b16 %v251
    %v1116 = vunpack.c.l.b16 %v252
    %v1117 = vunpack.c.h.b16 %v252
    %v1118 = vunpack.c.l.b16 %v253
    %v1119 = vunpack.c.h.b16 %v253
    %v1120 = vpack.c.b16 %v926, %v924
    %v1121 = vpack.c.b16 %v927, %v925
    %v1122 = vpack.c.b16 %v930, %v928
    %v1123 = vpack.c.b16 %v931, %v929
    %v1124 = vpack.c.b16 %v934, %v932
    %v1125 = vpack.c.b16 %v935, %v933
    %v1126 = vpack.c.b16 %v938, %v936
    %v1127 = vpack.c.b16 %v939, %v937
    %v1128 = vpack.c.b16 %v942, %v940
    %v1129 = vpack.c.b16 %v943, %v941
    %v1130 = vpack.c.b16 %v946, %v944
    %v1131 = vpack.c.b16 %v947, %v945
    %v1132 = vpack.c.b16 %v950, %v948
    %v1133 = vpack.c.b16 %v951, %v949
    %v1134 = vpack.c.b16 %v954, %v952
    %v1135 = vpack.c.b16 %v955, %v953
    %v1136 = vpack.c.b16 %v958, %v956
    %v1137 = vpack.c.b16 %v959, %v957
    %v1138 = vpack.c.b16 %v962, %v960
    %v1139 = vpack.c.b16 %v963, %v961
    %v1140 = vpack.c.b16 %v966, %v964
    %v1141 = vpack.c.b16 %v967, %v965
    %v1142 = vpack.c.b16 %v970, %v968
    %v1143 = vpack.c.b16 %v971, %v969
    %v1144 = vpack.c.b16 %v974, %v972
    %v1145 = vpack.c.b16 %v975, %v973
    %v1146 = vpack.c.b16 %v978, %v976
    %v1147 = vpack.c.b16 %v979, %v977
    %v1148 = vpack.c.b16 %v982, %v980
    %v1149 = vpack.c.b16 %v983, %v981
    %v1150 = vpack.c.b16 %v986, %v984
    %v1151 = vpack.c.b16 %v987, %v985
    %v1152 = vpack.c.b16 %v990, %v988
    %v1153 = vpack.c.b16 %v991, %v989
    %v1154 = vpack.c.b16 %v994, %v992
    %v1155 = vpack.c.b16 %v995, %v993
    %v1156 = vpack.c.b16 %v998, %v996
    %v1157 = vpack.c.b16 %v999, %v997
    %v1158 = vpack.c.b16 %v1002, %v1000
    %v1159 = vpack.c.b16 %v1003, %v1001
    %v1160 = vpack.c.b16 %v1006, %v1004
    %v1161 = vpack.c.b16 %v1007, %v1005
    %v1162 = vpack.c.b16 %v1010, %v1008
    %v1163 = vpack.c.b16 %v1011, %v1009
    %v1164 = vpack.c.b16 %v1014, %v1012
    %v1165 = vpack.c.b16 %v1015, %v1013
    %v1166 = vpack.c.b16 %v1018, %v1016
    %v1167 = vpack.c.b16 %v1019, %v1017
    %v1168 = vpack.c.b16 %v1022, %v1020
    %v1169 = vpack.c.b16 %v1023, %v1021
    %v1170 = vpack.c.b16 %v1026, %v1024
    %v1171 = vpack.c.b16 %v1027, %v1025
    %v1172 = vpack.c.b16 %v1030, %v1028
    %v1173 = vpack.c.b16 %v1031, %v1029
    %v1174 = vpack.c.b16 %v1034, %v1032
    %v1175 = vpack.c.b16 %v1035, %v1033
    %v1176 = vpack.c.b16 %v1038, %v1036
    %v1177 = vpack.c.b16 %v1039, %v1037
    %v1178 = vpack.c.b16 %v1042, %v1040
    %v1179 = vpack.c.b16 %v1043, %v1041
    %v1180 = vpack.c.b16 %v1046, %v1044
    %v1181 = vpack.c.b16 %v1047, %v1045
    %v1182 = vpack.c.b16 %v1050, %v1048
    %v1183 = vpack.c.b16 %v1051, %v1049
    %v1184 = vpack.c.b16 %v1054, %v1052
    %v1185 = vpack.c.b16 %v1055, %v1053
    %v1186 = vpack.c.b16 %v1058, %v1056
    %v1187 = vpack.c.b16 %v1059, %v1057
    %v1188 = vpack.c.b16 %v1062, %v1060
    %v1189 = vpack.c.b16 %v1063, %v1061
    %v1190 = vpack.c.b16 %v1066, %v1064
    %v1191 = vpack.c.b16 %v1067, %v1065
    %v1192 = vpack.c.b16 %v1070, %v1068
    %v1193 = vpack.c.b16 %v1071, %v1069
    %v1194 = vpack.c.b16 %v1074, %v1072
    %v1195 = vpack.c.b16 %v1075, %v1073
    %v1196 = vpack.c.b16 %v1078, %v1076
    %v1197 = vpack.c.b16 %v1079, %v1077
    %v1198 = vpack.c.b16 %v1082, %v1080
    %v1199 = vpack.c.b16 %v1083, %v1081
    %v1200 = vpack.c.b16 %v1086, %v1084
    %v1201 = vpack.c.b16 %v1087, %v1085
    %v1202 = vpack.c.b16 %v1090, %v1088
    %v1203 = vpack.c.b16 %v1091, %v1089
    %v1204 = vpack.c.b16 %v1094, %v1092
    %v1205 = vpack.c.b16 %v1095, %v1093
    %v1206 = vpack.c.b16 %v1098, %v1096
    %v1207 = vpack.c.b16 %v1099, %v1097
    %v1208 = vpack.c.b16 %v1102, %v1100
    %v1209 = vpack.c.b16 %v1103, %v1101
    %v1210 = vpack.c.b16 %v1106, %v1104
    %v1211 = vpack.c.b16 %v1107, %v1105
    %v1212 = vpack.c.b16 %v1110, %v1108
    %v1213 = vpack.c.b16 %v1111, %v1109
    %v1214 = vpack.c.b16 %v1114, %v1112
    %v1215 = vpack.c.b16 %v1115, %v1113
    %v1216 = vpack.c.b16 %v1118, %v1116
    %v1217 = vpack.c.b16 %v1119, %v1117
    %vm1316 = vcmask 130048
    %v1318 = vsel %vm1316, %v624, 0
    %v1321 = vsel %vm1316, %v631, 0
    %v1324 = vsel %vm1316, %v638, 0
    %v1327 = vsel %vm1316, %v645, 0
    %v1330 = vsel %vm1316, %v652, 0
    %v1333 = vsel %vm1316, %v659, 0
    %v1336 = vsel %vm1316, %v666, 0
    %v1339 = vsel %vm1316, %v673, 0
    %v1342 = vsel %vm1316, %v680, 0
    %v1345 = vsel %vm1316, %v687, 0
    %v1348 = vsel %vm1316, %v694, 0
    %v1351 = vsel %vm1316, %v701, 0
    %v1354 = vsel %vm1316, %v708, 0
    %v1357 = vsel %vm1316, %v715, 0
    %v1360 = vsel %vm1316, %v722, 0
    %v1363 = vsel %vm1316, %v729, 0
    %1365 = vmatprep.subr.bf16.mxu0 %v1135
    %1366 = vmatpush1.bf16.msra.mxu0 %v1134
    %1367 = vmatprep.subr.bf16.mxu0 %v1133
    %1368 = vmatpush1.bf16.msra.mxu0 %v1132
    %1369 = vmatprep.subr.bf16.mxu0 %v1131
    %1370 = vmatpush1.bf16.msra.mxu0 %v1130
    %1371 = vmatprep.subr.bf16.mxu0 %v1129
    %1372 = vmatpush1.bf16.msra.mxu0 %v1128
    %1373 = vmatprep.subr.bf16.mxu0 %v1127
    %1374 = vmatpush1.bf16.msra.mxu0 %v1126
    %1375 = vmatprep.subr.bf16.mxu0 %v1125
    %1376 = vmatpush1.bf16.msra.mxu0 %v1124
    %1377 = vmatprep.subr.bf16.mxu0 %v1123
    %1378 = vmatpush1.bf16.msra.mxu0 %v1122
    %1379 = vmatprep.subr.bf16.mxu0 %v1121
    %1380 = vmatpush1.bf16.msra.mxu0 %v1120
    %1381 = vmatprep.subr.bf16.mxu0 %v1151
    %1382 = vmatpush2.bf16.msra.mxu0 %v1150
    %1383 = vmatprep.subr.bf16.mxu0 %v1149
    %1384 = vmatpush2.bf16.msra.mxu0 %v1148
    %1385 = vmatprep.subr.bf16.mxu0 %v1147
    %1386 = vmatpush2.bf16.msra.mxu0 %v1146
    %1387 = vmatprep.subr.bf16.mxu0 %v1145
    %1388 = vmatpush2.bf16.msra.mxu0 %v1144
    %1389 = vmatprep.subr.bf16.mxu0 %v1143
    %1390 = vmatpush2.bf16.msra.mxu0 %v1142
    %1391 = vmatprep.subr.bf16.mxu0 %v1141
    %1392 = vmatpush2.bf16.msra.mxu0 %v1140
    %1393 = vmatprep.subr.bf16.mxu0 %v1139
    %1394 = vmatpush2.bf16.msra.mxu0 %v1138
    %1395 = vmatprep.subr.bf16.mxu0 %v1137
    %1396 = vmatpush2.bf16.msra.mxu0 %v1136
    %1397 = vmatprep.mubr.bf16.mxu0 %v619
    %1398 = vmatmul.mubr.bf16.gmra.mxu0 %v618
    %v1399 = vpop.f32.mrf.mxu0
    %v1400 = vadd.f32 %v259, %v1399
    %v1401 = vpop.f32.mrf.mxu0
    %v1402 = vadd.f32 %v263, %v1401
    %v1403 = vpop.f32.mrf.mxu0
    %v1404 = vadd.f32 %v259, %v1403
    %v1405 = vpop.f32.mrf.mxu0
    %v1406 = vadd.f32 %v263, %v1405
    %1407 = vmatprep.mubr.bf16.mxu0 %v626
    %1408 = vmatmul.mubr.bf16.gmra.mxu0 %v625
    %v1409 = vpop.f32.mrf.mxu0
    %v1410 = vadd.f32 %v259, %v1409
    %v1411 = vpop.f32.mrf.mxu0
    %v1412 = vadd.f32 %v263, %v1411
    %v1413 = vpop.f32.mrf.mxu0
    %v1414 = vadd.f32 %v259, %v1413
    %v1415 = vpop.f32.mrf.mxu0
    %v1416 = vadd.f32 %v263, %v1415
    %1417 = vmatprep.mubr.bf16.mxu0 %v633
    %1418 = vmatmul.mubr.bf16.gmra.mxu0 %v632
    %v1419 = vpop.f32.mrf.mxu0
    %v1420 = vadd.f32 %v259, %v1419
    %v1421 = vpop.f32.mrf.mxu0
    %v1422 = vadd.f32 %v263, %v1421
    %v1423 = vpop.f32.mrf.mxu0
    %v1424 = vadd.f32 %v259, %v1423
    %v1425 = vpop.f32.mrf.mxu0
    %v1426 = vadd.f32 %v263, %v1425
    %1427 = vmatprep.mubr.bf16.mxu0 %v640
    %1428 = vmatmul.mubr.bf16.gmra.mxu0 %v639
    %v1429 = vpop.f32.mrf.mxu0
    %v1430 = vadd.f32 %v259, %v1429
    %v1431 = vpop.f32.mrf.mxu0
    %v1432 = vadd.f32 %v263, %v1431
    %v1433 = vpop.f32.mrf.mxu0
    %v1434 = vadd.f32 %v259, %v1433
    %v1435 = vpop.f32.mrf.mxu0
    %v1436 = vadd.f32 %v263, %v1435
    %1437 = vmatprep.mubr.bf16.mxu0 %v647
    %1438 = vmatmul.mubr.bf16.gmra.mxu0 %v646
    %v1439 = vpop.f32.mrf.mxu0
    %v1440 = vadd.f32 %v259, %v1439
    %v1441 = vpop.f32.mrf.mxu0
    %v1442 = vadd.f32 %v263, %v1441
    %v1443 = vpop.f32.mrf.mxu0
    %v1444 = vadd.f32 %v259, %v1443
    %v1445 = vpop.f32.mrf.mxu0
    %v1446 = vadd.f32 %v263, %v1445
    %1447 = vmatprep.mubr.bf16.mxu0 %v654
    %1448 = vmatmul.mubr.bf16.gmra.mxu0 %v653
    %v1449 = vpop.f32.mrf.mxu0
    %v1450 = vadd.f32 %v259, %v1449
    %v1451 = vpop.f32.mrf.mxu0
    %v1452 = vadd.f32 %v263, %v1451
    %v1453 = vpop.f32.mrf.mxu0
    %v1454 = vadd.f32 %v259, %v1453
    %v1455 = vpop.f32.mrf.mxu0
    %v1456 = vadd.f32 %v263, %v1455
    %1457 = vmatprep.mubr.bf16.mxu0 %v661
    %1458 = vmatmul.mubr.bf16.gmra.mxu0 %v660
    %v1459 = vpop.f32.mrf.mxu0
    %v1460 = vadd.f32 %v259, %v1459
    %v1461 = vpop.f32.mrf.mxu0
    %v1462 = vadd.f32 %v263, %v1461
    %v1463 = vpop.f32.mrf.mxu0
    %v1464 = vadd.f32 %v259, %v1463
    %v1465 = vpop.f32.mrf.mxu0
    %v1466 = vadd.f32 %v263, %v1465
    %1467 = vmatprep.mubr.bf16.mxu0 %v668
    %1468 = vmatmul.mubr.bf16.gmra.mxu0 %v667
    %v1469 = vpop.f32.mrf.mxu0
    %v1470 = vadd.f32 %v259, %v1469
    %v1471 = vpop.f32.mrf.mxu0
    %v1472 = vadd.f32 %v263, %v1471
    %v1473 = vpop.f32.mrf.mxu0
    %v1474 = vadd.f32 %v259, %v1473
    %v1475 = vpop.f32.mrf.mxu0
    %v1476 = vadd.f32 %v263, %v1475
    %1477 = vmatprep.mubr.bf16.mxu0 %v675
    %1478 = vmatmul.mubr.bf16.gmra.mxu0 %v674
    %v1479 = vpop.f32.mrf.mxu0
    %v1480 = vadd.f32 %v259, %v1479
    %v1481 = vpop.f32.mrf.mxu0
    %v1482 = vadd.f32 %v263, %v1481
    %v1483 = vpop.f32.mrf.mxu0
    %v1484 = vadd.f32 %v259, %v1483
    %v1485 = vpop.f32.mrf.mxu0
    %v1486 = vadd.f32 %v263, %v1485
    %1487 = vmatprep.mubr.bf16.mxu0 %v682
    %1488 = vmatmul.mubr.bf16.gmra.mxu0 %v681
    %v1489 = vpop.f32.mrf.mxu0
    %v1490 = vadd.f32 %v259, %v1489
    %v1491 = vpop.f32.mrf.mxu0
    %v1492 = vadd.f32 %v263, %v1491
    %v1493 = vpop.f32.mrf.mxu0
    %v1494 = vadd.f32 %v259, %v1493
    %v1495 = vpop.f32.mrf.mxu0
    %v1496 = vadd.f32 %v263, %v1495
    %1497 = vmatprep.mubr.bf16.mxu0 %v689
    %1498 = vmatmul.mubr.bf16.gmra.mxu0 %v688
    %v1499 = vpop.f32.mrf.mxu0
    %v1500 = vadd.f32 %v259, %v1499
    %v1501 = vpop.f32.mrf.mxu0
    %v1502 = vadd.f32 %v263, %v1501
    %v1503 = vpop.f32.mrf.mxu0
    %v1504 = vadd.f32 %v259, %v1503
    %v1505 = vpop.f32.mrf.mxu0
    %v1506 = vadd.f32 %v263, %v1505
    %1507 = vmatprep.mubr.bf16.mxu0 %v696
    %1508 = vmatmul.mubr.bf16.gmra.mxu0 %v695
    %v1509 = vpop.f32.mrf.mxu0
    %v1510 = vadd.f32 %v259, %v1509
    %v1511 = vpop.f32.mrf.mxu0
    %v1512 = vadd.f32 %v263, %v1511
    %v1513 = vpop.f32.mrf.mxu0
    %v1514 = vadd.f32 %v259, %v1513
    %v1515 = vpop.f32.mrf.mxu0
    %v1516 = vadd.f32 %v263, %v1515
    %1517 = vmatprep.mubr.bf16.mxu0 %v703
    %1518 = vmatmul.mubr.bf16.gmra.mxu0 %v702
    %v1519 = vpop.f32.mrf.mxu0
    %v1520 = vadd.f32 %v259, %v1519
    %v1521 = vpop.f32.mrf.mxu0
    %v1522 = vadd.f32 %v263, %v1521
    %v1523 = vpop.f32.mrf.mxu0
    %v1524 = vadd.f32 %v259, %v1523
    %v1525 = vpop.f32.mrf.mxu0
    %v1526 = vadd.f32 %v263, %v1525
    %1527 = vmatprep.mubr.bf16.mxu0 %v710
    %1528 = vmatmul.mubr.bf16.gmra.mxu0 %v709
    %v1529 = vpop.f32.mrf.mxu0
    %v1530 = vadd.f32 %v259, %v1529
    %v1531 = vpop.f32.mrf.mxu0
    %v1532 = vadd.f32 %v263, %v1531
    %v1533 = vpop.f32.mrf.mxu0
    %v1534 = vadd.f32 %v259, %v1533
    %v1535 = vpop.f32.mrf.mxu0
    %v1536 = vadd.f32 %v263, %v1535
    %1537 = vmatprep.mubr.bf16.mxu0 %v717
    %1538 = vmatmul.mubr.bf16.gmra.mxu0 %v716
    %v1539 = vpop.f32.mrf.mxu0
    %v1540 = vadd.f32 %v259, %v1539
    %v1541 = vpop.f32.mrf.mxu0
    %v1542 = vadd.f32 %v263, %v1541
    %v1543 = vpop.f32.mrf.mxu0
    %v1544 = vadd.f32 %v259, %v1543
    %v1545 = vpop.f32.mrf.mxu0
    %v1546 = vadd.f32 %v263, %v1545
    %1547 = vmatprep.mubr.bf16.mxu0 %v724
    %1548 = vmatmul.mubr.bf16.gmra.mxu0 %v723
    %v1549 = vpop.f32.mrf.mxu0
    %v1550 = vadd.f32 %v259, %v1549
    %v1551 = vpop.f32.mrf.mxu0
    %v1552 = vadd.f32 %v263, %v1551
    %v1553 = vpop.f32.mrf.mxu0
    %v1554 = vadd.f32 %v259, %v1553
    %v1555 = vpop.f32.mrf.mxu0
    %v1556 = vadd.f32 %v263, %v1555
    %1557 = vdwg.mxu0
    %1558 = vmatprep.subr.bf16.mxu0 %v1167
    %1559 = vmatpush1.bf16.msra.mxu0 %v1166
    %1560 = vmatprep.subr.bf16.mxu0 %v1165
    %1561 = vmatpush1.bf16.msra.mxu0 %v1164
    %1562 = vmatprep.subr.bf16.mxu0 %v1163
    %1563 = vmatpush1.bf16.msra.mxu0 %v1162
    %1564 = vmatprep.subr.bf16.mxu0 %v1161
    %1565 = vmatpush1.bf16.msra.mxu0 %v1160
    %1566 = vmatprep.subr.bf16.mxu0 %v1159
    %1567 = vmatpush1.bf16.msra.mxu0 %v1158
    %1568 = vmatprep.subr.bf16.mxu0 %v1157
    %1569 = vmatpush1.bf16.msra.mxu0 %v1156
    %1570 = vmatprep.subr.bf16.mxu0 %v1155
    %1571 = vmatpush1.bf16.msra.mxu0 %v1154
    %1572 = vmatprep.subr.bf16.mxu0 %v1153
    %1573 = vmatpush1.bf16.msra.mxu0 %v1152
    %1574 = vmatprep.subr.bf16.mxu0 %v1183
    %1575 = vmatpush2.bf16.msra.mxu0 %v1182
    %1576 = vmatprep.subr.bf16.mxu0 %v1181
    %1577 = vmatpush2.bf16.msra.mxu0 %v1180
    %1578 = vmatprep.subr.bf16.mxu0 %v1179
    %1579 = vmatpush2.bf16.msra.mxu0 %v1178
    %1580 = vmatprep.subr.bf16.mxu0 %v1177
    %1581 = vmatpush2.bf16.msra.mxu0 %v1176
    %1582 = vmatprep.subr.bf16.mxu0 %v1175
    %1583 = vmatpush2.bf16.msra.mxu0 %v1174
    %1584 = vmatprep.subr.bf16.mxu0 %v1173
    %1585 = vmatpush2.bf16.msra.mxu0 %v1172
    %1586 = vmatprep.subr.bf16.mxu0 %v1171
    %1587 = vmatpush2.bf16.msra.mxu0 %v1170
    %1588 = vmatprep.subr.bf16.mxu0 %v1169
    %1589 = vmatpush2.bf16.msra.mxu0 %v1168
    %1590 = vmatprep.mubr.bf16.mxu0 %v621
    %1591 = vmatmul.mubr.bf16.gmra.mxu0 %v620
    %v1592 = vpop.f32.mrf.mxu0
    %v1593 = vadd.f32 %v1400, %v1592
    %v1594 = vpop.f32.mrf.mxu0
    %v1595 = vadd.f32 %v1402, %v1594
    %v1596 = vpop.f32.mrf.mxu0
    %v1597 = vadd.f32 %v1404, %v1596
    %v1598 = vpop.f32.mrf.mxu0
    %v1599 = vadd.f32 %v1406, %v1598
    %1600 = vmatprep.mubr.bf16.mxu0 %v628
    %1601 = vmatmul.mubr.bf16.gmra.mxu0 %v627
    %v1602 = vpop.f32.mrf.mxu0
    %v1603 = vadd.f32 %v1410, %v1602
    %v1604 = vpop.f32.mrf.mxu0
    %v1605 = vadd.f32 %v1412, %v1604
    %v1606 = vpop.f32.mrf.mxu0
    %v1607 = vadd.f32 %v1414, %v1606
    %v1608 = vpop.f32.mrf.mxu0
    %v1609 = vadd.f32 %v1416, %v1608
    %1610 = vmatprep.mubr.bf16.mxu0 %v635
    %1611 = vmatmul.mubr.bf16.gmra.mxu0 %v634
    %v1612 = vpop.f32.mrf.mxu0
    %v1613 = vadd.f32 %v1420, %v1612
    %v1614 = vpop.f32.mrf.mxu0
    %v1615 = vadd.f32 %v1422, %v1614
    %v1616 = vpop.f32.mrf.mxu0
    %v1617 = vadd.f32 %v1424, %v1616
    %v1618 = vpop.f32.mrf.mxu0
    %v1619 = vadd.f32 %v1426, %v1618
    %1620 = vmatprep.mubr.bf16.mxu0 %v642
    %1621 = vmatmul.mubr.bf16.gmra.mxu0 %v641
    %v1622 = vpop.f32.mrf.mxu0
    %v1623 = vadd.f32 %v1430, %v1622
    %v1624 = vpop.f32.mrf.mxu0
    %v1625 = vadd.f32 %v1432, %v1624
    %v1626 = vpop.f32.mrf.mxu0
    %v1627 = vadd.f32 %v1434, %v1626
    %v1628 = vpop.f32.mrf.mxu0
    %v1629 = vadd.f32 %v1436, %v1628
    %1630 = vmatprep.mubr.bf16.mxu0 %v649
    %1631 = vmatmul.mubr.bf16.gmra.mxu0 %v648
    %v1632 = vpop.f32.mrf.mxu0
    %v1633 = vadd.f32 %v1440, %v1632
    %v1634 = vpop.f32.mrf.mxu0
    %v1635 = vadd.f32 %v1442, %v1634
    %v1636 = vpop.f32.mrf.mxu0
    %v1637 = vadd.f32 %v1444, %v1636
    %v1638 = vpop.f32.mrf.mxu0
    %v1639 = vadd.f32 %v1446, %v1638
    %1640 = vmatprep.mubr.bf16.mxu0 %v656
    %1641 = vmatmul.mubr.bf16.gmra.mxu0 %v655
    %v1642 = vpop.f32.mrf.mxu0
    %v1643 = vadd.f32 %v1450, %v1642
    %v1644 = vpop.f32.mrf.mxu0
    %v1645 = vadd.f32 %v1452, %v1644
    %v1646 = vpop.f32.mrf.mxu0
    %v1647 = vadd.f32 %v1454, %v1646
    %v1648 = vpop.f32.mrf.mxu0
    %v1649 = vadd.f32 %v1456, %v1648
    %1650 = vmatprep.mubr.bf16.mxu0 %v663
    %1651 = vmatmul.mubr.bf16.gmra.mxu0 %v662
    %v1652 = vpop.f32.mrf.mxu0
    %v1653 = vadd.f32 %v1460, %v1652
    %v1654 = vpop.f32.mrf.mxu0
    %v1655 = vadd.f32 %v1462, %v1654
    %v1656 = vpop.f32.mrf.mxu0
    %v1657 = vadd.f32 %v1464, %v1656
    %v1658 = vpop.f32.mrf.mxu0
    %v1659 = vadd.f32 %v1466, %v1658
    %1660 = vmatprep.mubr.bf16.mxu0 %v670
    %1661 = vmatmul.mubr.bf16.gmra.mxu0 %v669
    %v1662 = vpop.f32.mrf.mxu0
    %v1663 = vadd.f32 %v1470, %v1662
    %v1664 = vpop.f32.mrf.mxu0
    %v1665 = vadd.f32 %v1472, %v1664
    %v1666 = vpop.f32.mrf.mxu0
    %v1667 = vadd.f32 %v1474, %v1666
    %v1668 = vpop.f32.mrf.mxu0
    %v1669 = vadd.f32 %v1476, %v1668
    %1670 = vmatprep.mubr.bf16.mxu0 %v677
    %1671 = vmatmul.mubr.bf16.gmra.mxu0 %v676
    %v1672 = vpop.f32.mrf.mxu0
    %v1673 = vadd.f32 %v1480, %v1672
    %v1674 = vpop.f32.mrf.mxu0
    %v1675 = vadd.f32 %v1482, %v1674
    %v1676 = vpop.f32.mrf.mxu0
    %v1677 = vadd.f32 %v1484, %v1676
    %v1678 = vpop.f32.mrf.mxu0
    %v1679 = vadd.f32 %v1486, %v1678
    %1680 = vmatprep.mubr.bf16.mxu0 %v684
    %1681 = vmatmul.mubr.bf16.gmra.mxu0 %v683
    %v1682 = vpop.f32.mrf.mxu0
    %v1683 = vadd.f32 %v1490, %v1682
    %v1684 = vpop.f32.mrf.mxu0
    %v1685 = vadd.f32 %v1492, %v1684
    %v1686 = vpop.f32.mrf.mxu0
    %v1687 = vadd.f32 %v1494, %v1686
    %v1688 = vpop.f32.mrf.mxu0
    %v1689 = vadd.f32 %v1496, %v1688
    %1690 = vmatprep.mubr.bf16.mxu0 %v691
    %1691 = vmatmul.mubr.bf16.gmra.mxu0 %v690
    %v1692 = vpop.f32.mrf.mxu0
    %v1693 = vadd.f32 %v1500, %v1692
    %v1694 = vpop.f32.mrf.mxu0
    %v1695 = vadd.f32 %v1502, %v1694
    %v1696 = vpop.f32.mrf.mxu0
    %v1697 = vadd.f32 %v1504, %v1696
    %v1698 = vpop.f32.mrf.mxu0
    %v1699 = vadd.f32 %v1506, %v1698
    %1700 = vmatprep.mubr.bf16.mxu0 %v698
    %1701 = vmatmul.mubr.bf16.gmra.mxu0 %v697
    %v1702 = vpop.f32.mrf.mxu0
    %v1703 = vadd.f32 %v1510, %v1702
    %v1704 = vpop.f32.mrf.mxu0
    %v1705 = vadd.f32 %v1512, %v1704
    %v1706 = vpop.f32.mrf.mxu0
    %v1707 = vadd.f32 %v1514, %v1706
    %v1708 = vpop.f32.mrf.mxu0
    %v1709 = vadd.f32 %v1516, %v1708
    %1710 = vmatprep.mubr.bf16.mxu0 %v705
    %1711 = vmatmul.mubr.bf16.gmra.mxu0 %v704
    %v1712 = vpop.f32.mrf.mxu0
    %v1713 = vadd.f32 %v1520, %v1712
    %v1714 = vpop.f32.mrf.mxu0
    %v1715 = vadd.f32 %v1522, %v1714
    %v1716 = vpop.f32.mrf.mxu0
    %v1717 = vadd.f32 %v1524, %v1716
    %v1718 = vpop.f32.mrf.mxu0
    %v1719 = vadd.f32 %v1526, %v1718
    %1720 = vmatprep.mubr.bf16.mxu0 %v712
    %1721 = vmatmul.mubr.bf16.gmra.mxu0 %v711
    %v1722 = vpop.f32.mrf.mxu0
    %v1723 = vadd.f32 %v1530, %v1722
    %v1724 = vpop.f32.mrf.mxu0
    %v1725 = vadd.f32 %v1532, %v1724
    %v1726 = vpop.f32.mrf.mxu0
    %v1727 = vadd.f32 %v1534, %v1726
    %v1728 = vpop.f32.mrf.mxu0
    %v1729 = vadd.f32 %v1536, %v1728
    %1730 = vmatprep.mubr.bf16.mxu0 %v719
    %1731 = vmatmul.mubr.bf16.gmra.mxu0 %v718
    %v1732 = vpop.f32.mrf.mxu0
    %v1733 = vadd.f32 %v1540, %v1732
    %v1734 = vpop.f32.mrf.mxu0
    %v1735 = vadd.f32 %v1542, %v1734
    %v1736 = vpop.f32.mrf.mxu0
    %v1737 = vadd.f32 %v1544, %v1736
    %v1738 = vpop.f32.mrf.mxu0
    %v1739 = vadd.f32 %v1546, %v1738
    %1740 = vmatprep.mubr.bf16.mxu0 %v726
    %1741 = vmatmul.mubr.bf16.gmra.mxu0 %v725
    %v1742 = vpop.f32.mrf.mxu0
    %v1743 = vadd.f32 %v1550, %v1742
    %v1744 = vpop.f32.mrf.mxu0
    %v1745 = vadd.f32 %v1552, %v1744
    %v1746 = vpop.f32.mrf.mxu0
    %v1747 = vadd.f32 %v1554, %v1746
    %v1748 = vpop.f32.mrf.mxu0
    %v1749 = vadd.f32 %v1556, %v1748
    %1750 = vdwg.mxu0
    %1751 = vmatprep.subr.bf16.mxu0 %v1199
    %1752 = vmatpush1.bf16.msra.mxu0 %v1198
    %1753 = vmatprep.subr.bf16.mxu0 %v1197
    %1754 = vmatpush1.bf16.msra.mxu0 %v1196
    %1755 = vmatprep.subr.bf16.mxu0 %v1195
    %1756 = vmatpush1.bf16.msra.mxu0 %v1194
    %1757 = vmatprep.subr.bf16.mxu0 %v1193
    %1758 = vmatpush1.bf16.msra.mxu0 %v1192
    %1759 = vmatprep.subr.bf16.mxu0 %v1191
    %1760 = vmatpush1.bf16.msra.mxu0 %v1190
    %1761 = vmatprep.subr.bf16.mxu0 %v1189
    %1762 = vmatpush1.bf16.msra.mxu0 %v1188
    %1763 = vmatprep.subr.bf16.mxu0 %v1187
    %1764 = vmatpush1.bf16.msra.mxu0 %v1186
    %1765 = vmatprep.subr.bf16.mxu0 %v1185
    %1766 = vmatpush1.bf16.msra.mxu0 %v1184
    %1767 = vmatprep.subr.bf16.mxu0 %v1215
    %1768 = vmatpush2.bf16.msra.mxu0 %v1214
    %1769 = vmatprep.subr.bf16.mxu0 %v1213
    %1770 = vmatpush2.bf16.msra.mxu0 %v1212
    %1771 = vmatprep.subr.bf16.mxu0 %v1211
    %1772 = vmatpush2.bf16.msra.mxu0 %v1210
    %1773 = vmatprep.subr.bf16.mxu0 %v1209
    %1774 = vmatpush2.bf16.msra.mxu0 %v1208
    %1775 = vmatprep.subr.bf16.mxu0 %v1207
    %1776 = vmatpush2.bf16.msra.mxu0 %v1206
    %1777 = vmatprep.subr.bf16.mxu0 %v1205
    %1778 = vmatpush2.bf16.msra.mxu0 %v1204
    %1779 = vmatprep.subr.bf16.mxu0 %v1203
    %1780 = vmatpush2.bf16.msra.mxu0 %v1202
    %1781 = vmatprep.subr.bf16.mxu0 %v1201
    %1782 = vmatpush2.bf16.msra.mxu0 %v1200
    %1783 = vmatprep.mubr.bf16.mxu0 %v623
    %1784 = vmatmul.mubr.bf16.gmra.mxu0 %v622
    %v1785 = vpop.f32.mrf.mxu0
    %v1786 = vadd.f32 %v1593, %v1785
    %v1787 = vpop.f32.mrf.mxu0
    %v1788 = vadd.f32 %v1595, %v1787
    %v1789 = vpop.f32.mrf.mxu0
    %v1790 = vadd.f32 %v1597, %v1789
    %v1791 = vpop.f32.mrf.mxu0
    %v1792 = vadd.f32 %v1599, %v1791
    %1793 = vmatprep.mubr.bf16.mxu0 %v630
    %1794 = vmatmul.mubr.bf16.gmra.mxu0 %v629
    %v1795 = vpop.f32.mrf.mxu0
    %v1796 = vadd.f32 %v1603, %v1795
    %v1797 = vpop.f32.mrf.mxu0
    %v1798 = vadd.f32 %v1605, %v1797
    %v1799 = vpop.f32.mrf.mxu0
    %v1800 = vadd.f32 %v1607, %v1799
    %v1801 = vpop.f32.mrf.mxu0
    %v1802 = vadd.f32 %v1609, %v1801
    %1803 = vmatprep.mubr.bf16.mxu0 %v637
    %1804 = vmatmul.mubr.bf16.gmra.mxu0 %v636
    %v1805 = vpop.f32.mrf.mxu0
    %v1806 = vadd.f32 %v1613, %v1805
    %v1807 = vpop.f32.mrf.mxu0
    %v1808 = vadd.f32 %v1615, %v1807
    %v1809 = vpop.f32.mrf.mxu0
    %v1810 = vadd.f32 %v1617, %v1809
    %v1811 = vpop.f32.mrf.mxu0
    %v1812 = vadd.f32 %v1619, %v1811
    %1813 = vmatprep.mubr.bf16.mxu0 %v644
    %1814 = vmatmul.mubr.bf16.gmra.mxu0 %v643
    %v1815 = vpop.f32.mrf.mxu0
    %v1816 = vadd.f32 %v1623, %v1815
    %v1817 = vpop.f32.mrf.mxu0
    %v1818 = vadd.f32 %v1625, %v1817
    %v1819 = vpop.f32.mrf.mxu0
    %v1820 = vadd.f32 %v1627, %v1819
    %v1821 = vpop.f32.mrf.mxu0
    %v1822 = vadd.f32 %v1629, %v1821
    %1823 = vmatprep.mubr.bf16.mxu0 %v651
    %1824 = vmatmul.mubr.bf16.gmra.mxu0 %v650
    %v1825 = vpop.f32.mrf.mxu0
    %v1826 = vadd.f32 %v1633, %v1825
    %v1827 = vpop.f32.mrf.mxu0
    %v1828 = vadd.f32 %v1635, %v1827
    %v1829 = vpop.f32.mrf.mxu0
    %v1830 = vadd.f32 %v1637, %v1829
    %v1831 = vpop.f32.mrf.mxu0
    %v1832 = vadd.f32 %v1639, %v1831
    %1833 = vmatprep.mubr.bf16.mxu0 %v658
    %1834 = vmatmul.mubr.bf16.gmra.mxu0 %v657
    %v1835 = vpop.f32.mrf.mxu0
    %v1836 = vadd.f32 %v1643, %v1835
    %v1837 = vpop.f32.mrf.mxu0
    %v1838 = vadd.f32 %v1645, %v1837
    %v1839 = vpop.f32.mrf.mxu0
    %v1840 = vadd.f32 %v1647, %v1839
    %v1841 = vpop.f32.mrf.mxu0
    %v1842 = vadd.f32 %v1649, %v1841
    %1843 = vmatprep.mubr.bf16.mxu0 %v665
    %1844 = vmatmul.mubr.bf16.gmra.mxu0 %v664
    %v1845 = vpop.f32.mrf.mxu0
    %v1846 = vadd.f32 %v1653, %v1845
    %v1847 = vpop.f32.mrf.mxu0
    %v1848 = vadd.f32 %v1655, %v1847
    %v1849 = vpop.f32.mrf.mxu0
    %v1850 = vadd.f32 %v1657, %v1849
    %v1851 = vpop.f32.mrf.mxu0
    %v1852 = vadd.f32 %v1659, %v1851
    %1853 = vmatprep.mubr.bf16.mxu0 %v672
    %1854 = vmatmul.mubr.bf16.gmra.mxu0 %v671
    %v1855 = vpop.f32.mrf.mxu0
    %v1856 = vadd.f32 %v1663, %v1855
    %v1857 = vpop.f32.mrf.mxu0
    %v1858 = vadd.f32 %v1665, %v1857
    %v1859 = vpop.f32.mrf.mxu0
    %v1860 = vadd.f32 %v1667, %v1859
    %v1861 = vpop.f32.mrf.mxu0
    %v1862 = vadd.f32 %v1669, %v1861
    %1863 = vmatprep.mubr.bf16.mxu0 %v679
    %1864 = vmatmul.mubr.bf16.gmra.mxu0 %v678
    %v1865 = vpop.f32.mrf.mxu0
    %v1866 = vadd.f32 %v1673, %v1865
    %v1867 = vpop.f32.mrf.mxu0
    %v1868 = vadd.f32 %v1675, %v1867
    %v1869 = vpop.f32.mrf.mxu0
    %v1870 = vadd.f32 %v1677, %v1869
    %v1871 = vpop.f32.mrf.mxu0
    %v1872 = vadd.f32 %v1679, %v1871
    %1873 = vmatprep.mubr.bf16.mxu0 %v686
    %1874 = vmatmul.mubr.bf16.gmra.mxu0 %v685
    %v1875 = vpop.f32.mrf.mxu0
    %v1876 = vadd.f32 %v1683, %v1875
    %v1877 = vpop.f32.mrf.mxu0
    %v1878 = vadd.f32 %v1685, %v1877
    %v1879 = vpop.f32.mrf.mxu0
    %v1880 = vadd.f32 %v1687, %v1879
    %v1881 = vpop.f32.mrf.mxu0
    %v1882 = vadd.f32 %v1689, %v1881
    %1883 = vmatprep.mubr.bf16.mxu0 %v693
    %1884 = vmatmul.mubr.bf16.gmra.mxu0 %v692
    %v1885 = vpop.f32.mrf.mxu0
    %v1886 = vadd.f32 %v1693, %v1885
    %v1887 = vpop.f32.mrf.mxu0
    %v1888 = vadd.f32 %v1695, %v1887
    %v1889 = vpop.f32.mrf.mxu0
    %v1890 = vadd.f32 %v1697, %v1889
    %v1891 = vpop.f32.mrf.mxu0
    %v1892 = vadd.f32 %v1699, %v1891
    %1893 = vmatprep.mubr.bf16.mxu0 %v700
    %1894 = vmatmul.mubr.bf16.gmra.mxu0 %v699
    %v1895 = vpop.f32.mrf.mxu0
    %v1896 = vadd.f32 %v1703, %v1895
    %v1897 = vpop.f32.mrf.mxu0
    %v1898 = vadd.f32 %v1705, %v1897
    %v1899 = vpop.f32.mrf.mxu0
    %v1900 = vadd.f32 %v1707, %v1899
    %v1901 = vpop.f32.mrf.mxu0
    %v1902 = vadd.f32 %v1709, %v1901
    %1903 = vmatprep.mubr.bf16.mxu0 %v707
    %1904 = vmatmul.mubr.bf16.gmra.mxu0 %v706
    %v1905 = vpop.f32.mrf.mxu0
    %v1906 = vadd.f32 %v1713, %v1905
    %v1907 = vpop.f32.mrf.mxu0
    %v1908 = vadd.f32 %v1715, %v1907
    %v1909 = vpop.f32.mrf.mxu0
    %v1910 = vadd.f32 %v1717, %v1909
    %v1911 = vpop.f32.mrf.mxu0
    %v1912 = vadd.f32 %v1719, %v1911
    %1913 = vmatprep.mubr.bf16.mxu0 %v714
    %1914 = vmatmul.mubr.bf16.gmra.mxu0 %v713
    %v1915 = vpop.f32.mrf.mxu0
    %v1916 = vadd.f32 %v1723, %v1915
    %v1917 = vpop.f32.mrf.mxu0
    %v1918 = vadd.f32 %v1725, %v1917
    %v1919 = vpop.f32.mrf.mxu0
    %v1920 = vadd.f32 %v1727, %v1919
    %v1921 = vpop.f32.mrf.mxu0
    %v1922 = vadd.f32 %v1729, %v1921
    %1923 = vmatprep.mubr.bf16.mxu0 %v721
    %1924 = vmatmul.mubr.bf16.gmra.mxu0 %v720
    %v1925 = vpop.f32.mrf.mxu0
    %v1926 = vadd.f32 %v1733, %v1925
    %v1927 = vpop.f32.mrf.mxu0
    %v1928 = vadd.f32 %v1735, %v1927
    %v1929 = vpop.f32.mrf.mxu0
    %v1930 = vadd.f32 %v1737, %v1929
    %v1931 = vpop.f32.mrf.mxu0
    %v1932 = vadd.f32 %v1739, %v1931
    %1933 = vmatprep.mubr.bf16.mxu0 %v728
    %1934 = vmatmul.mubr.bf16.gmra.mxu0 %v727
    %v1935 = vpop.f32.mrf.mxu0
    %v1936 = vadd.f32 %v1743, %v1935
    %v1937 = vpop.f32.mrf.mxu0
    %v1938 = vadd.f32 %v1745, %v1937
    %v1939 = vpop.f32.mrf.mxu0
    %v1940 = vadd.f32 %v1747, %v1939
    %v1941 = vpop.f32.mrf.mxu0
    %v1942 = vadd.f32 %v1749, %v1941
    %1943 = vdwg.mxu0
    %1944 = vmatprep.subr.bf16.mxu0 0
    %1945 = vmatpush1.bf16.msra.mxu0 0
    %1946 = vmatprep.subr.bf16.mxu0 0
    %1947 = vmatpush1.bf16.msra.mxu0 0
    %1948 = vmatprep.subr.bf16.mxu0 0
    %1949 = vmatpush1.bf16.msra.mxu0 0
    %1950 = vmatprep.subr.bf16.mxu0 0
    %1951 = vmatpush1.bf16.msra.mxu0 0
    %1952 = vmatprep.subr.bf16.mxu0 0
    %1953 = vmatpush1.bf16.msra.mxu0 0
    %1954 = vmatprep.subr.bf16.mxu0 0
    %1955 = vmatpush1.bf16.msra.mxu0 0
    %1956 = vmatprep.subr.bf16.mxu0 0
    %1957 = vmatpush1.bf16.msra.mxu0 0
    %1958 = vmatprep.subr.bf16.mxu0 %v1217
    %1959 = vmatpush1.bf16.msra.mxu0 %v1216
    %1960 = vmatprep.subr.bf16.mxu0 0
    %1961 = vmatpush2.bf16.msra.mxu0 0
    %1962 = vmatprep.subr.bf16.mxu0 0
    %1963 = vmatpush2.bf16.msra.mxu0 0
    %1964 = vmatprep.subr.bf16.mxu0 0
    %1965 = vmatpush2.bf16.msra.mxu0 0
    %1966 = vmatprep.subr.bf16.mxu0 0
    %1967 = vmatpush2.bf16.msra.mxu0 0
    %1968 = vmatprep.subr.bf16.mxu0 0
    %1969 = vmatpush2.bf16.msra.mxu0 0
    %1970 = vmatprep.subr.bf16.mxu0 0
    %1971 = vmatpush2.bf16.msra.mxu0 0
    %1972 = vmatprep.subr.bf16.mxu0 0
    %1973 = vmatpush2.bf16.msra.mxu0 0
    %1974 = vmatprep.subr.bf16.mxu0 0
    %1975 = vmatpush2.bf16.msra.mxu0 0
    %1976 = vmatprep.mubr.bf16.mxu0 0
    %1977 = vmatmul.mubr.bf16.gmra.mxu0 %v1318
    %v1978 = vpop.f32.mrf.mxu0
    %v1979 = vadd.f32 %v1786, %v1978
    %v1980 = vpop.f32.mrf.mxu0
    %v1981 = vadd.f32 %v1788, %v1980
    %v1982 = vpop.f32.mrf.mxu0
    %v1983 = vadd.f32 %v1790, %v1982
    %v1984 = vpop.f32.mrf.mxu0
    %v1985 = vadd.f32 %v1792, %v1984
    %1986 = vmatprep.mubr.bf16.mxu0 0
    %1987 = vmatmul.mubr.bf16.gmra.mxu0 %v1321
    %v1988 = vpop.f32.mrf.mxu0
    %v1989 = vadd.f32 %v1796, %v1988
    %v1990 = vpop.f32.mrf.mxu0
    %v1991 = vadd.f32 %v1798, %v1990
    %v1992 = vpop.f32.mrf.mxu0
    %v1993 = vadd.f32 %v1800, %v1992
    %v1994 = vpop.f32.mrf.mxu0
    %v1995 = vadd.f32 %v1802, %v1994
    %1996 = vmatprep.mubr.bf16.mxu0 0
    %1997 = vmatmul.mubr.bf16.gmra.mxu0 %v1324
    %v1998 = vpop.f32.mrf.mxu0
    %v1999 = vadd.f32 %v1806, %v1998
    %v2000 = vpop.f32.mrf.mxu0
    %v2001 = vadd.f32 %v1808, %v2000
    %v2002 = vpop.f32.mrf.mxu0
    %v2003 = vadd.f32 %v1810, %v2002
    %v2004 = vpop.f32.mrf.mxu0
    %v2005 = vadd.f32 %v1812, %v2004
    %2006 = vmatprep.mubr.bf16.mxu0 0
    %2007 = vmatmul.mubr.bf16.gmra.mxu0 %v1327
    %v2008 = vpop.f32.mrf.mxu0
    %v2009 = vadd.f32 %v1816, %v2008
    %v2010 = vpop.f32.mrf.mxu0
    %v2011 = vadd.f32 %v1818, %v2010
    %v2012 = vpop.f32.mrf.mxu0
    %v2013 = vadd.f32 %v1820, %v2012
    %v2014 = vpop.f32.mrf.mxu0
    %v2015 = vadd.f32 %v1822, %v2014
    %2016 = vmatprep.mubr.bf16.mxu0 0
    %2017 = vmatmul.mubr.bf16.gmra.mxu0 %v1330
    %v2018 = vpop.f32.mrf.mxu0
    %v2019 = vadd.f32 %v1826, %v2018
    %v2020 = vpop.f32.mrf.mxu0
    %v2021 = vadd.f32 %v1828, %v2020
    %v2022 = vpop.f32.mrf.mxu0
    %v2023 = vadd.f32 %v1830, %v2022
    %v2024 = vpop.f32.mrf.mxu0
    %v2025 = vadd.f32 %v1832, %v2024
    %2026 = vmatprep.mubr.bf16.mxu0 0
    %2027 = vmatmul.mubr.bf16.gmra.mxu0 %v1333
    %v2028 = vpop.f32.mrf.mxu0
    %v2029 = vadd.f32 %v1836, %v2028
    %v2030 = vpop.f32.mrf.mxu0
    %v2031 = vadd.f32 %v1838, %v2030
    %v2032 = vpop.f32.mrf.mxu0
    %v2033 = vadd.f32 %v1840, %v2032
    %v2034 = vpop.f32.mrf.mxu0
    %v2035 = vadd.f32 %v1842, %v2034
    %2036 = vmatprep.mubr.bf16.mxu0 0
    %2037 = vmatmul.mubr.bf16.gmra.mxu0 %v1336
    %v2038 = vpop.f32.mrf.mxu0
    %v2039 = vadd.f32 %v1846, %v2038
    %v2040 = vpop.f32.mrf.mxu0
    %v2041 = vadd.f32 %v1848, %v2040
    %v2042 = vpop.f32.mrf.mxu0
    %v2043 = vadd.f32 %v1850, %v2042
    %v2044 = vpop.f32.mrf.mxu0
    %v2045 = vadd.f32 %v1852, %v2044
    %2046 = vmatprep.mubr.bf16.mxu0 0
    %2047 = vmatmul.mubr.bf16.gmra.mxu0 %v1339
    %v2048 = vpop.f32.mrf.mxu0
    %v2049 = vadd.f32 %v1856, %v2048
    %v2050 = vpop.f32.mrf.mxu0
    %v2051 = vadd.f32 %v1858, %v2050
    %v2052 = vpop.f32.mrf.mxu0
    %v2053 = vadd.f32 %v1860, %v2052
    %v2054 = vpop.f32.mrf.mxu0
    %v2055 = vadd.f32 %v1862, %v2054
    %2056 = vmatprep.mubr.bf16.mxu0 0
    %2057 = vmatmul.mubr.bf16.gmra.mxu0 %v1342
    %v2058 = vpop.f32.mrf.mxu0
    %v2059 = vadd.f32 %v1866, %v2058
    %v2060 = vpop.f32.mrf.mxu0
    %v2061 = vadd.f32 %v1868, %v2060
    %v2062 = vpop.f32.mrf.mxu0
    %v2063 = vadd.f32 %v1870, %v2062
    %v2064 = vpop.f32.mrf.mxu0
    %v2065 = vadd.f32 %v1872, %v2064
    %2066 = vmatprep.mubr.bf16.mxu0 0
    %2067 = vmatmul.mubr.bf16.gmra.mxu0 %v1345
    %v2068 = vpop.f32.mrf.mxu0
    %v2069 = vadd.f32 %v1876, %v2068
    %v2070 = vpop.f32.mrf.mxu0
    %v2071 = vadd.f32 %v1878, %v2070
    %v2072 = vpop.f32.mrf.mxu0
    %v2073 = vadd.f32 %v1880, %v2072
    %v2074 = vpop.f32.mrf.mxu0
    %v2075 = vadd.f32 %v1882, %v2074
    %2076 = vmatprep.mubr.bf16.mxu0 0
    %2077 = vmatmul.mubr.bf16.gmra.mxu0 %v1348
    %v2078 = vpop.f32.mrf.mxu0
    %v2079 = vadd.f32 %v1886, %v2078
    %v2080 = vpop.f32.mrf.mxu0
    %v2081 = vadd.f32 %v1888, %v2080
    %v2082 = vpop.f32.mrf.mxu0
    %v2083 = vadd.f32 %v1890, %v2082
    %v2084 = vpop.f32.mrf.mxu0
    %v2085 = vadd.f32 %v1892, %v2084
    %2086 = vmatprep.mubr.bf16.mxu0 0
    %2087 = vmatmul.mubr.bf16.gmra.mxu0 %v1351
    %v2088 = vpop.f32.mrf.mxu0
    %v2089 = vadd.f32 %v1896, %v2088
    %v2090 = vpop.f32.mrf.mxu0
    %v2091 = vadd.f32 %v1898, %v2090
    %v2092 = vpop.f32.mrf.mxu0
    %v2093 = vadd.f32 %v1900, %v2092
    %v2094 = vpop.f32.mrf.mxu0
    %v2095 = vadd.f32 %v1902, %v2094
    %2096 = vmatprep.mubr.bf16.mxu0 0
    %2097 = vmatmul.mubr.bf16.gmra.mxu0 %v1354
    %v2098 = vpop.f32.mrf.mxu0
    %v2099 = vadd.f32 %v1906, %v2098
    %v2100 = vpop.f32.mrf.mxu0
    %v2101 = vadd.f32 %v1908, %v2100
    %v2102 = vpop.f32.mrf.mxu0
    %v2103 = vadd.f32 %v1910, %v2102
    %v2104 = vpop.f32.mrf.mxu0
    %v2105 = vadd.f32 %v1912, %v2104
    %2106 = vmatprep.mubr.bf16.mxu0 0
    %2107 = vmatmul.mubr.bf16.gmra.mxu0 %v1357
    %v2108 = vpop.f32.mrf.mxu0
    %v2109 = vadd.f32 %v1916, %v2108
    %v2110 = vpop.f32.mrf.mxu0
    %v2111 = vadd.f32 %v1918, %v2110
    %v2112 = vpop.f32.mrf.mxu0
    %v2113 = vadd.f32 %v1920, %v2112
    %v2114 = vpop.f32.mrf.mxu0
    %v2115 = vadd.f32 %v1922, %v2114
    %2116 = vmatprep.mubr.bf16.mxu0 0
    %2117 = vmatmul.mubr.bf16.gmra.mxu0 %v1360
    %v2118 = vpop.f32.mrf.mxu0
    %v2119 = vadd.f32 %v1926, %v2118
    %v2120 = vpop.f32.mrf.mxu0
    %v2121 = vadd.f32 %v1928, %v2120
    %v2122 = vpop.f32.mrf.mxu0
    %v2123 = vadd.f32 %v1930, %v2122
    %v2124 = vpop.f32.mrf.mxu0
    %v2125 = vadd.f32 %v1932, %v2124
    %2126 = vmatprep.mubr.bf16.mxu0 0
    %2127 = vmatmul.mubr.bf16.gmra.mxu0 %v1363
    %v2128 = vpop.f32.mrf.mxu0
    %v2129 = vadd.f32 %v1936, %v2128
    %v2130 = vpop.f32.mrf.mxu0
    %v2131 = vadd.f32 %v1938, %v2130
    %v2132 = vpop.f32.mrf.mxu0
    %v2133 = vadd.f32 %v1940, %v2132
    %v2134 = vpop.f32.mrf.mxu0
    %v2135 = vadd.f32 %v1942, %v2134
    %2136 = vdwg.mxu0
    %v2137 = vmax.f32 %v1979, 0.0
    %v2138 = vmax.f32 %v1981, 0.0
    %v2139 = vmax.f32 %v1983, 0.0
    %v2140 = vmax.f32 %v1985, 0.0
    %v2141 = vmax.f32 %v1989, 0.0
    %v2142 = vmax.f32 %v1991, 0.0
    %v2143 = vmax.f32 %v1993, 0.0
    %v2144 = vmax.f32 %v1995, 0.0
    %v2145 = vmax.f32 %v1999, 0.0
    %v2146 = vmax.f32 %v2001, 0.0
    %v2147 = vmax.f32 %v2003, 0.0
    %v2148 = vmax.f32 %v2005, 0.0
    %v2149 = vmax.f32 %v2009, 0.0
    %v2150 = vmax.f32 %v2011, 0.0
    %v2151 = vmax.f32 %v2013, 0.0
    %v2152 = vmax.f32 %v2015, 0.0
    %v2153 = vmax.f32 %v2019, 0.0
    %v2154 = vmax.f32 %v2021, 0.0
    %v2155 = vmax.f32 %v2023, 0.0
    %v2156 = vmax.f32 %v2025, 0.0
    %v2157 = vmax.f32 %v2029, 0.0
    %v2158 = vmax.f32 %v2031, 0.0
    %v2159 = vmax.f32 %v2033, 0.0
    %v2160 = vmax.f32 %v2035, 0.0
    %v2161 = vmax.f32 %v2039, 0.0
    %v2162 = vmax.f32 %v2041, 0.0
    %v2163 = vmax.f32 %v2043, 0.0
    %v2164 = vmax.f32 %v2045, 0.0
    %v2165 = vmax.f32 %v2049, 0.0
    %v2166 = vmax.f32 %v2051, 0.0
    %v2167 = vmax.f32 %v2053, 0.0
    %v2168 = vmax.f32 %v2055, 0.0
    %v2169 = vmax.f32 %v2059, 0.0
    %v2170 = vmax.f32 %v2061, 0.0
    %v2171 = vmax.f32 %v2063, 0.0
    %v2172 = vmax.f32 %v2065, 0.0
    %v2173 = vmax.f32 %v2069, 0.0
    %v2174 = vmax.f32 %v2071, 0.0
    %v2175 = vmax.f32 %v2073, 0.0
    %v2176 = vmax.f32 %v2075, 0.0
    %v2177 = vmax.f32 %v2079, 0.0
    %v2178 = vmax.f32 %v2081, 0.0
    %v2179 = vmax.f32 %v2083, 0.0
    %v2180 = vmax.f32 %v2085, 0.0
    %v2181 = vmax.f32 %v2089, 0.0
    %v2182 = vmax.f32 %v2091, 0.0
    %v2183 = vmax.f32 %v2093, 0.0
    %v2184 = vmax.f32 %v2095, 0.0
    %v2185 = vmax.f32 %v2099, 0.0
    %v2186 = vmax.f32 %v2101, 0.0
    %v2187 = vmax.f32 %v2103, 0.0
    %v2188 = vmax.f32 %v2105, 0.0
    %v2189 = vmax.f32 %v2109, 0.0
    %v2190 = vmax.f32 %v2111, 0.0
    %v2191 = vmax.f32 %v2113, 0.0
    %v2192 = vmax.f32 %v2115, 0.0
    %v2193 = vmax.f32 %v2119, 0.0
    %v2194 = vmax.f32 %v2121, 0.0
    %v2195 = vmax.f32 %v2123, 0.0
    %v2196 = vmax.f32 %v2125, 0.0
    %v2197 = vmax.f32 %v2129, 0.0
    %v2198 = vmax.f32 %v2131, 0.0
    %v2199 = vmax.f32 %v2133, 0.0
    %v2200 = vmax.f32 %v2135, 0.0
    %v2201 = vpack.c.bf16 %v2139, %v2137
    %v2202 = vpack.c.bf16 %v2140, %v2138
    %v2203 = vpack.c.bf16 %v2143, %v2141
    %v2204 = vpack.c.bf16 %v2144, %v2142
    %v2205 = vpack.c.bf16 %v2147, %v2145
    %v2206 = vpack.c.bf16 %v2148, %v2146
    %v2207 = vpack.c.bf16 %v2151, %v2149
    %v2208 = vpack.c.bf16 %v2152, %v2150
    %v2209 = vpack.c.bf16 %v2155, %v2153
    %v2210 = vpack.c.bf16 %v2156, %v2154
    %v2211 = vpack.c.bf16 %v2159, %v2157
    %v2212 = vpack.c.bf16 %v2160, %v2158
    %v2213 = vpack.c.bf16 %v2163, %v2161
    %v2214 = vpack.c.bf16 %v2164, %v2162
    %v2215 = vpack.c.bf16 %v2167, %v2165
    %v2216 = vpack.c.bf16 %v2168, %v2166
    %v2217 = vpack.c.bf16 %v2171, %v2169
    %v2218 = vpack.c.bf16 %v2172, %v2170
    %v2219 = vpack.c.bf16 %v2175, %v2173
    %v2220 = vpack.c.bf16 %v2176, %v2174
    %v2221 = vpack.c.bf16 %v2179, %v2177
    %v2222 = vpack.c.bf16 %v2180, %v2178
    %v2223 = vpack.c.bf16 %v2183, %v2181
    %v2224 = vpack.c.bf16 %v2184, %v2182
    %v2225 = vpack.c.bf16 %v2187, %v2185
    %v2226 = vpack.c.bf16 %v2188, %v2186
    %v2227 = vpack.c.bf16 %v2191, %v2189
    %v2228 = vpack.c.bf16 %v2192, %v2190
    %v2229 = vpack.c.bf16 %v2195, %v2193
    %v2230 = vpack.c.bf16 %v2196, %v2194
    %v2231 = vpack.c.bf16 %v2199, %v2197
    %v2232 = vpack.c.bf16 %v2200, %v2198
    %v2233 = vld [vmem:[%s3] sm:$0xf]
    %v2234 = vld [vmem:[%s3 + $0x4] sm:$0xf]
    %v2235 = vld [vmem:[%s3 + $0x8] sm:$0xf]
    %v2236 = vld [vmem:[%s3 + $0xc] sm:$0xf]
    %v2237 = vld [vmem:[%s3 + $0x10] sm:$0xf]
    %v2238 = vld [vmem:[%s3 + $0x14] sm:$0xf]
    %v2239 = vld [vmem:[%s3 + $0x18] sm:$0xf]
    %v2240 = vld [vmem:[%s3 + $0x1c] sm:$0xf]
    %v2241 = vld [vmem:[%s3 + $0x20] sm:$0xf]
    %v2242 = vld [vmem:[%s3 + $0x24] sm:$0xf]
    %v2243 = vld [vmem:[%s3 + $0x28] sm:$0xf]
    %v2244 = vld [vmem:[%s3 + $0x2c] sm:$0xf]
    %v2245 = vld [vmem:[%s3 + $0x30] sm:$0xf]
    %v2246 = vld [vmem:[%s3 + $0x34] sm:$0xf]
    %v2247 = vld [vmem:[%s3 + $0x38] sm:$0xf]
    %v2248 = vld [vmem:[%s3 + $0x3c] sm:$0xf]
    %v2249 = vld [vmem:[%s3 + $0x40] sm:$0xf]
    %v2250 = vld [vmem:[%s3 + $0x44] sm:$0xf]
    %v2251 = vld [vmem:[%s3 + $0x48] sm:$0xf]
    %v2252 = vld [vmem:[%s3 + $0x4c] sm:$0xf]
    %v2253 = vld [vmem:[%s3 + $0x50] sm:$0xf]
    %v2254 = vld [vmem:[%s3 + $0x54] sm:$0xf]
    %v2255 = vld [vmem:[%s3 + $0x58] sm:$0xf]
    %v2256 = vld [vmem:[%s3 + $0x5c] sm:$0xf]
    %v2257 = vld [vmem:[%s3 + $0x60] sm:$0xf]
    %v2258 = vld [vmem:[%s3 + $0x64] sm:$0xf]
    %v2259 = vld [vmem:[%s3 + $0x68] sm:$0xf]
    %v2260 = vld [vmem:[%s3 + $0x6c] sm:$0xf]
    %v2261 = vld [vmem:[%s3 + $0x70] sm:$0xf]
    %v2262 = vld [vmem:[%s3 + $0x74] sm:$0xf]
    %v2263 = vld [vmem:[%s3 + $0x78] sm:$0xf]
    %v2264 = vld [vmem:[%s3 + $0x7c] sm:$0xf]
    %v2265 = vld [vmem:[%s4] sm:$0x1]
    %v2267 = vlaneseq
    %v2268 = vshrl.u32 %v2267, 7
    %v2269 = vsub.s32 0, %v2268
    %v2270 = vrot.slane %v2265, %v2269
    %v2304 = vunpack.c.l.b16 %v2233
    %v2305 = vunpack.c.l.b16 %v2234
    %v2306 = vunpack.c.l.b16 %v2235
    %v2307 = vunpack.c.l.b16 %v2236
    %v2308 = vunpack.c.l.b16 %v2237
    %v2309 = vunpack.c.l.b16 %v2238
    %v2310 = vunpack.c.l.b16 %v2239
    %v2311 = vunpack.c.l.b16 %v2240
    %v2312 = vunpack.c.l.b16 %v2241
    %v2313 = vunpack.c.l.b16 %v2242
    %v2314 = vunpack.c.l.b16 %v2243
    %v2315 = vunpack.c.l.b16 %v2244
    %v2316 = vunpack.c.l.b16 %v2245
    %v2317 = vunpack.c.l.b16 %v2246
    %v2318 = vunpack.c.l.b16 %v2247
    %v2319 = vunpack.c.l.b16 %v2248
    %v2320 = vunpack.c.l.b16 %v2249
    %v2321 = vunpack.c.l.b16 %v2250
    %v2322 = vunpack.c.l.b16 %v2251
    %v2323 = vunpack.c.l.b16 %v2252
    %v2324 = vunpack.c.l.b16 %v2253
    %v2325 = vunpack.c.l.b16 %v2254
    %v2326 = vunpack.c.l.b16 %v2255
    %v2327 = vunpack.c.l.b16 %v2256
    %v2328 = vunpack.c.l.b16 %v2257
    %v2329 = vunpack.c.l.b16 %v2258
    %v2330 = vunpack.c.l.b16 %v2259
    %v2331 = vunpack.c.l.b16 %v2260
    %v2332 = vunpack.c.l.b16 %v2261
    %v2333 = vunpack.c.l.b16 %v2262
    %v2334 = vunpack.c.l.b16 %v2263
    %v2335 = vunpack.c.l.b16 %v2264
    %v2336 = vpack.c.b16 %v2305, %v2304
    %v2337 = vpack.c.b16 %v2307, %v2306
    %v2338 = vpack.c.b16 %v2309, %v2308
    %v2339 = vpack.c.b16 %v2311, %v2310
    %v2340 = vpack.c.b16 %v2313, %v2312
    %v2341 = vpack.c.b16 %v2315, %v2314
    %v2342 = vpack.c.b16 %v2317, %v2316
    %v2343 = vpack.c.b16 %v2319, %v2318
    %v2344 = vpack.c.b16 %v2321, %v2320
    %v2345 = vpack.c.b16 %v2323, %v2322
    %v2346 = vpack.c.b16 %v2325, %v2324
    %v2347 = vpack.c.b16 %v2327, %v2326
    %v2348 = vpack.c.b16 %v2329, %v2328
    %v2349 = vpack.c.b16 %v2331, %v2330
    %v2350 = vpack.c.b16 %v2333, %v2332
    %v2351 = vpack.c.b16 %v2335, %v2334
    %2368 = vmatprep.subr.bf16.mxu0 0
    %2369 = vmatpush1.bf16.msra.mxu0 %v2343
    %2370 = vmatprep.subr.bf16.mxu0 0
    %2371 = vmatpush1.bf16.msra.mxu0 %v2342
    %2372 = vmatprep.subr.bf16.mxu0 0
    %2373 = vmatpush1.bf16.msra.mxu0 %v2341
    %2374 = vmatprep.subr.bf16.mxu0 0
    %2375 = vmatpush1.bf16.msra.mxu0 %v2340
    %2376 = vmatprep.subr.bf16.mxu0 0
    %2377 = vmatpush1.bf16.msra.mxu0 %v2339
    %2378 = vmatprep.subr.bf16.mxu0 0
    %2379 = vmatpush1.bf16.msra.mxu0 %v2338
    %2380 = vmatprep.subr.bf16.mxu0 0
    %2381 = vmatpush1.bf16.msra.mxu0 %v2337
    %2382 = vmatprep.subr.bf16.mxu0 0
    %2383 = vmatpush1.bf16.msra.mxu0 %v2336
    %2384 = vmatprep.subr.bf16.mxu0 0
    %2385 = vmatpush2.bf16.msra.mxu0 %v2351
    %2386 = vmatprep.subr.bf16.mxu0 0
    %2387 = vmatpush2.bf16.msra.mxu0 %v2350
    %2388 = vmatprep.subr.bf16.mxu0 0
    %2389 = vmatpush2.bf16.msra.mxu0 %v2349
    %2390 = vmatprep.subr.bf16.mxu0 0
    %2391 = vmatpush2.bf16.msra.mxu0 %v2348
    %2392 = vmatprep.subr.bf16.mxu0 0
    %2393 = vmatpush2.bf16.msra.mxu0 %v2347
    %2394 = vmatprep.subr.bf16.mxu0 0
    %2395 = vmatpush2.bf16.msra.mxu0 %v2346
    %2396 = vmatprep.subr.bf16.mxu0 0
    %2397 = vmatpush2.bf16.msra.mxu0 %v2345
    %2398 = vmatprep.subr.bf16.mxu0 0
    %2399 = vmatpush2.bf16.msra.mxu0 %v2344
    %2400 = vmatprep.mubr.bf16.mxu0 %v2202
    %2401 = vmatmul.mubr.bf16.gmra.mxu0 %v2201
    %v2402 = vpop.f32.mrf.mxu0
    %v2403 = vadd.f32 %v2270, %v2402
    %v2404 = vpop.f32.mrf.mxu0
    %v2405 = vpop.f32.mrf.mxu0
    %v2406 = vadd.f32 %v2270, %v2405
    %v2407 = vpop.f32.mrf.mxu0
    %2408 = vmatprep.mubr.bf16.mxu0 %v2204
    %2409 = vmatmul.mubr.bf16.gmra.mxu0 %v2203
    %v2410 = vpop.f32.mrf.mxu0
    %v2411 = vadd.f32 %v2270, %v2410
    %v2412 = vpop.f32.mrf.mxu0
    %v2413 = vpop.f32.mrf.mxu0
    %v2414 = vadd.f32 %v2270, %v2413
    %v2415 = vpop.f32.mrf.mxu0
    %2416 = vmatprep.mubr.bf16.mxu0 %v2206
    %2417 = vmatmul.mubr.bf16.gmra.mxu0 %v2205
    %v2418 = vpop.f32.mrf.mxu0
    %v2419 = vadd.f32 %v2270, %v2418
    %v2420 = vpop.f32.mrf.mxu0
    %v2421 = vpop.f32.mrf.mxu0
    %v2422 = vadd.f32 %v2270, %v2421
    %v2423 = vpop.f32.mrf.mxu0
    %2424 = vmatprep.mubr.bf16.mxu0 %v2208
    %2425 = vmatmul.mubr.bf16.gmra.mxu0 %v2207
    %v2426 = vpop.f32.mrf.mxu0
    %v2427 = vadd.f32 %v2270, %v2426
    %v2428 = vpop.f32.mrf.mxu0
    %v2429 = vpop.f32.mrf.mxu0
    %v2430 = vadd.f32 %v2270, %v2429
    %v2431 = vpop.f32.mrf.mxu0
    %2432 = vmatprep.mubr.bf16.mxu0 %v2210
    %2433 = vmatmul.mubr.bf16.gmra.mxu0 %v2209
    %v2434 = vpop.f32.mrf.mxu0
    %v2435 = vadd.f32 %v2270, %v2434
    %v2436 = vpop.f32.mrf.mxu0
    %v2437 = vpop.f32.mrf.mxu0
    %v2438 = vadd.f32 %v2270, %v2437
    %v2439 = vpop.f32.mrf.mxu0
    %2440 = vmatprep.mubr.bf16.mxu0 %v2212
    %2441 = vmatmul.mubr.bf16.gmra.mxu0 %v2211
    %v2442 = vpop.f32.mrf.mxu0
    %v2443 = vadd.f32 %v2270, %v2442
    %v2444 = vpop.f32.mrf.mxu0
    %v2445 = vpop.f32.mrf.mxu0
    %v2446 = vadd.f32 %v2270, %v2445
    %v2447 = vpop.f32.mrf.mxu0
    %2448 = vmatprep.mubr.bf16.mxu0 %v2214
    %2449 = vmatmul.mubr.bf16.gmra.mxu0 %v2213
    %v2450 = vpop.f32.mrf.mxu0
    %v2451 = vadd.f32 %v2270, %v2450
    %v2452 = vpop.f32.mrf.mxu0
    %v2453 = vpop.f32.mrf.mxu0
    %v2454 = vadd.f32 %v2270, %v2453
    %v2455 = vpop.f32.mrf.mxu0
    %2456 = vmatprep.mubr.bf16.mxu0 %v2216
    %2457 = vmatmul.mubr.bf16.gmra.mxu0 %v2215
    %v2458 = vpop.f32.mrf.mxu0
    %v2459 = vadd.f32 %v2270, %v2458
    %v2460 = vpop.f32.mrf.mxu0
    %v2461 = vpop.f32.mrf.mxu0
    %v2462 = vadd.f32 %v2270, %v2461
    %v2463 = vpop.f32.mrf.mxu0
    %2464 = vmatprep.mubr.bf16.mxu0 %v2218
    %2465 = vmatmul.mubr.bf16.gmra.mxu0 %v2217
    %v2466 = vpop.f32.mrf.mxu0
    %v2467 = vadd.f32 %v2270, %v2466
    %v2468 = vpop.f32.mrf.mxu0
    %v2469 = vpop.f32.mrf.mxu0
    %v2470 = vadd.f32 %v2270, %v2469
    %v2471 = vpop.f32.mrf.mxu0
    %2472 = vmatprep.mubr.bf16.mxu0 %v2220
    %2473 = vmatmul.mubr.bf16.gmra.mxu0 %v2219
    %v2474 = vpop.f32.mrf.mxu0
    %v2475 = vadd.f32 %v2270, %v2474
    %v2476 = vpop.f32.mrf.mxu0
    %v2477 = vpop.f32.mrf.mxu0
    %v2478 = vadd.f32 %v2270, %v2477
    %v2479 = vpop.f32.mrf.mxu0
    %2480 = vmatprep.mubr.bf16.mxu0 %v2222
    %2481 = vmatmul.mubr.bf16.gmra.mxu0 %v2221
    %v2482 = vpop.f32.mrf.mxu0
    %v2483 = vadd.f32 %v2270, %v2482
    %v2484 = vpop.f32.mrf.mxu0
    %v2485 = vpop.f32.mrf.mxu0
    %v2486 = vadd.f32 %v2270, %v2485
    %v2487 = vpop.f32.mrf.mxu0
    %2488 = vmatprep.mubr.bf16.mxu0 %v2224
    %2489 = vmatmul.mubr.bf16.gmra.mxu0 %v2223
    %v2490 = vpop.f32.mrf.mxu0
    %v2491 = vadd.f32 %v2270, %v2490
    %v2492 = vpop.f32.mrf.mxu0
    %v2493 = vpop.f32.mrf.mxu0
    %v2494 = vadd.f32 %v2270, %v2493
    %v2495 = vpop.f32.mrf.mxu0
    %2496 = vmatprep.mubr.bf16.mxu0 %v2226
    %2497 = vmatmul.mubr.bf16.gmra.mxu0 %v2225
    %v2498 = vpop.f32.mrf.mxu0
    %v2499 = vadd.f32 %v2270, %v2498
    %v2500 = vpop.f32.mrf.mxu0
    %v2501 = vpop.f32.mrf.mxu0
    %v2502 = vadd.f32 %v2270, %v2501
    %v2503 = vpop.f32.mrf.mxu0
    %2504 = vmatprep.mubr.bf16.mxu0 %v2228
    %2505 = vmatmul.mubr.bf16.gmra.mxu0 %v2227
    %v2506 = vpop.f32.mrf.mxu0
    %v2507 = vadd.f32 %v2270, %v2506
    %v2508 = vpop.f32.mrf.mxu0
    %v2509 = vpop.f32.mrf.mxu0
    %v2510 = vadd.f32 %v2270, %v2509
    %v2511 = vpop.f32.mrf.mxu0
    %2512 = vmatprep.mubr.bf16.mxu0 %v2230
    %2513 = vmatmul.mubr.bf16.gmra.mxu0 %v2229
    %v2514 = vpop.f32.mrf.mxu0
    %v2515 = vadd.f32 %v2270, %v2514
    %v2516 = vpop.f32.mrf.mxu0
    %v2517 = vpop.f32.mrf.mxu0
    %v2518 = vadd.f32 %v2270, %v2517
    %v2519 = vpop.f32.mrf.mxu0
    %2520 = vmatprep.mubr.bf16.mxu0 %v2232
    %2521 = vmatmul.mubr.bf16.gmra.mxu0 %v2231
    %v2522 = vpop.f32.mrf.mxu0
    %v2523 = vadd.f32 %v2270, %v2522
    %v2524 = vpop.f32.mrf.mxu0
    %v2525 = vpop.f32.mrf.mxu0
    %v2526 = vadd.f32 %v2270, %v2525
    %v2527 = vpop.f32.mrf.mxu0
    %2528 = vdwg.mxu0
    %v2529 = vmax.f32 %v2403, 0.0
    %v2530 = vmax.f32 %v2406, 0.0
    %v2531 = vmax.f32 %v2411, 0.0
    %v2532 = vmax.f32 %v2414, 0.0
    %v2533 = vmax.f32 %v2419, 0.0
    %v2534 = vmax.f32 %v2422, 0.0
    %v2535 = vmax.f32 %v2427, 0.0
    %v2536 = vmax.f32 %v2430, 0.0
    %v2537 = vmax.f32 %v2435, 0.0
    %v2538 = vmax.f32 %v2438, 0.0
    %v2539 = vmax.f32 %v2443, 0.0
    %v2540 = vmax.f32 %v2446, 0.0
    %v2541 = vmax.f32 %v2451, 0.0
    %v2542 = vmax.f32 %v2454, 0.0
    %v2543 = vmax.f32 %v2459, 0.0
    %v2544 = vmax.f32 %v2462, 0.0
    %v2545 = vmax.f32 %v2467, 0.0
    %v2546 = vmax.f32 %v2470, 0.0
    %v2547 = vmax.f32 %v2475, 0.0
    %v2548 = vmax.f32 %v2478, 0.0
    %v2549 = vmax.f32 %v2483, 0.0
    %v2550 = vmax.f32 %v2486, 0.0
    %v2551 = vmax.f32 %v2491, 0.0
    %v2552 = vmax.f32 %v2494, 0.0
    %v2553 = vmax.f32 %v2499, 0.0
    %v2554 = vmax.f32 %v2502, 0.0
    %v2555 = vmax.f32 %v2507, 0.0
    %v2556 = vmax.f32 %v2510, 0.0
    %v2557 = vmax.f32 %v2515, 0.0
    %v2558 = vmax.f32 %v2518, 0.0
    %v2559 = vmax.f32 %v2523, 0.0
    %v2560 = vmax.f32 %v2526, 0.0
    %v2561 = vpack.c.bf16 %v2530, %v2529
    %v2562 = vpack.c.bf16 %v2532, %v2531
    %v2563 = vpack.c.bf16 %v2534, %v2533
    %v2564 = vpack.c.bf16 %v2536, %v2535
    %v2565 = vpack.c.bf16 %v2538, %v2537
    %v2566 = vpack.c.bf16 %v2540, %v2539
    %v2567 = vpack.c.bf16 %v2542, %v2541
    %v2568 = vpack.c.bf16 %v2544, %v2543
    %v2569 = vpack.c.bf16 %v2546, %v2545
    %v2570 = vpack.c.bf16 %v2548, %v2547
    %v2571 = vpack.c.bf16 %v2550, %v2549
    %v2572 = vpack.c.bf16 %v2552, %v2551
    %v2573 = vpack.c.bf16 %v2554, %v2553
    %v2574 = vpack.c.bf16 %v2556, %v2555
    %v2575 = vpack.c.bf16 %v2558, %v2557
    %v2576 = vpack.c.bf16 %v2560, %v2559
    %v2577 = vld [vmem:[%s5] sm:$0xf]
    %v2578 = vld [vmem:[%s5 + $0x4] sm:$0xf]
    %v2579 = vld [vmem:[%s5 + $0x8] sm:$0xf]
    %v2580 = vld [vmem:[%s5 + $0xc] sm:$0xf]
    %v2581 = vld [vmem:[%s5 + $0x10] sm:$0xf]
    %v2582 = vld [vmem:[%s5 + $0x14] sm:$0xf]
    %v2583 = vld [vmem:[%s5 + $0x18] sm:$0xf]
    %v2584 = vld [vmem:[%s5 + $0x1c] sm:$0xf]
    %v2585 = vld [vmem:[%s5 + $0x20] sm:$0xf]
    %v2586 = vld [vmem:[%s5 + $0x24] sm:$0xf]
    %v2587 = vld [vmem:[%s5 + $0x28] sm:$0xf]
    %v2588 = vld [vmem:[%s5 + $0x2c] sm:$0xf]
    %v2589 = vld [vmem:[%s5 + $0x30] sm:$0xf]
    %v2590 = vld [vmem:[%s5 + $0x34] sm:$0xf]
    %v2591 = vld [vmem:[%s5 + $0x38] sm:$0xf]
    %v2592 = vld [vmem:[%s5 + $0x3c] sm:$0xf]
    %v2593 = vld [vmem:[%s6] sm:$0x1]
    %v2595 = vlaneseq
    %v2596 = vshrl.u32 %v2595, 7
    %v2597 = vsub.s32 0, %v2596
    %v2598 = vrot.slane %v2593, %v2597
    %v2616 = vunpack.c.l.b16 %v2577
    %v2617 = vunpack.c.l.b16 %v2578
    %v2618 = vunpack.c.l.b16 %v2579
    %v2619 = vunpack.c.l.b16 %v2580
    %v2620 = vunpack.c.l.b16 %v2581
    %v2621 = vunpack.c.l.b16 %v2582
    %v2622 = vunpack.c.l.b16 %v2583
    %v2623 = vunpack.c.l.b16 %v2584
    %v2624 = vunpack.c.l.b16 %v2585
    %v2625 = vunpack.c.l.b16 %v2586
    %v2626 = vunpack.c.l.b16 %v2587
    %v2627 = vunpack.c.l.b16 %v2588
    %v2628 = vunpack.c.l.b16 %v2589
    %v2629 = vunpack.c.l.b16 %v2590
    %v2630 = vunpack.c.l.b16 %v2591
    %v2631 = vunpack.c.l.b16 %v2592
    %v2632 = vpack.c.b16 %v2617, %v2616
    %v2633 = vpack.c.b16 %v2619, %v2618
    %v2634 = vpack.c.b16 %v2621, %v2620
    %v2635 = vpack.c.b16 %v2623, %v2622
    %v2636 = vpack.c.b16 %v2625, %v2624
    %v2637 = vpack.c.b16 %v2627, %v2626
    %v2638 = vpack.c.b16 %v2629, %v2628
    %v2639 = vpack.c.b16 %v2631, %v2630
    %2648 = vmatprep.subr.bf16.mxu0 0
    %2649 = vmatpush1.bf16.msra.mxu0 %v2639
    %2650 = vmatprep.subr.bf16.mxu0 0
    %2651 = vmatpush1.bf16.msra.mxu0 %v2638
    %2652 = vmatprep.subr.bf16.mxu0 0
    %2653 = vmatpush1.bf16.msra.mxu0 %v2637
    %2654 = vmatprep.subr.bf16.mxu0 0
    %2655 = vmatpush1.bf16.msra.mxu0 %v2636
    %2656 = vmatprep.subr.bf16.mxu0 0
    %2657 = vmatpush1.bf16.msra.mxu0 %v2635
    %2658 = vmatprep.subr.bf16.mxu0 0
    %2659 = vmatpush1.bf16.msra.mxu0 %v2634
    %2660 = vmatprep.subr.bf16.mxu0 0
    %2661 = vmatpush1.bf16.msra.mxu0 %v2633
    %2662 = vmatprep.subr.bf16.mxu0 0
    %2663 = vmatpush1.bf16.msra.mxu0 %v2632
    %2664 = vmatprep.subr.bf16.mxu0 0
    %2665 = vmatpush2.bf16.msra.mxu0 0
    %2666 = vmatprep.subr.bf16.mxu0 0
    %2667 = vmatpush2.bf16.msra.mxu0 0
    %2668 = vmatprep.subr.bf16.mxu0 0
    %2669 = vmatpush2.bf16.msra.mxu0 0
    %2670 = vmatprep.subr.bf16.mxu0 0
    %2671 = vmatpush2.bf16.msra.mxu0 0
    %2672 = vmatprep.subr.bf16.mxu0 0
    %2673 = vmatpush2.bf16.msra.mxu0 0
    %2674 = vmatprep.subr.bf16.mxu0 0
    %2675 = vmatpush2.bf16.msra.mxu0 0
    %2676 = vmatprep.subr.bf16.mxu0 0
    %2677 = vmatpush2.bf16.msra.mxu0 0
    %2678 = vmatprep.subr.bf16.mxu0 0
    %2679 = vmatpush2.bf16.msra.mxu0 0
    %2680 = vmatprep.mubr.bf16.mxu0 0
    %2681 = vmatmul.mubr.bf16.gmra.mxu0 %v2561
    %v2682 = vpop.f32.mrf.mxu0
    %v2683 = vadd.f32 %v2598, %v2682
    %v2684 = vpop.f32.mrf.mxu0
    %v2685 = vpop.f32.mrf.mxu0
    %v2686 = vadd.f32 %v2598, %v2685
    %v2687 = vpop.f32.mrf.mxu0
    %2688 = vmatprep.mubr.bf16.mxu0 0
    %2689 = vmatmul.mubr.bf16.gmra.mxu0 %v2562
    %v2690 = vpop.f32.mrf.mxu0
    %v2691 = vadd.f32 %v2598, %v2690
    %v2692 = vpop.f32.mrf.mxu0
    %v2693 = vpop.f32.mrf.mxu0
    %v2694 = vadd.f32 %v2598, %v2693
    %v2695 = vpop.f32.mrf.mxu0
    %2696 = vmatprep.mubr.bf16.mxu0 0
    %2697 = vmatmul.mubr.bf16.gmra.mxu0 %v2563
    %v2698 = vpop.f32.mrf.mxu0
    %v2699 = vadd.f32 %v2598, %v2698
    %v2700 = vpop.f32.mrf.mxu0
    %v2701 = vpop.f32.mrf.mxu0
    %v2702 = vadd.f32 %v2598, %v2701
    %v2703 = vpop.f32.mrf.mxu0
    %2704 = vmatprep.mubr.bf16.mxu0 0
    %2705 = vmatmul.mubr.bf16.gmra.mxu0 %v2564
    %v2706 = vpop.f32.mrf.mxu0
    %v2707 = vadd.f32 %v2598, %v2706
    %v2708 = vpop.f32.mrf.mxu0
    %v2709 = vpop.f32.mrf.mxu0
    %v2710 = vadd.f32 %v2598, %v2709
    %v2711 = vpop.f32.mrf.mxu0
    %2712 = vmatprep.mubr.bf16.mxu0 0
    %2713 = vmatmul.mubr.bf16.gmra.mxu0 %v2565
    %v2714 = vpop.f32.mrf.mxu0
    %v2715 = vadd.f32 %v2598, %v2714
    %v2716 = vpop.f32.mrf.mxu0
    %v2717 = vpop.f32.mrf.mxu0
    %v2718 = vadd.f32 %v2598, %v2717
    %v2719 = vpop.f32.mrf.mxu0
    %2720 = vmatprep.mubr.bf16.mxu0 0
    %2721 = vmatmul.mubr.bf16.gmra.mxu0 %v2566
    %v2722 = vpop.f32.mrf.mxu0
    %v2723 = vadd.f32 %v2598, %v2722
    %v2724 = vpop.f32.mrf.mxu0
    %v2725 = vpop.f32.mrf.mxu0
    %v2726 = vadd.f32 %v2598, %v2725
    %v2727 = vpop.f32.mrf.mxu0
    %2728 = vmatprep.mubr.bf16.mxu0 0
    %2729 = vmatmul.mubr.bf16.gmra.mxu0 %v2567
    %v2730 = vpop.f32.mrf.mxu0
    %v2731 = vadd.f32 %v2598, %v2730
    %v2732 = vpop.f32.mrf.mxu0
    %v2733 = vpop.f32.mrf.mxu0
    %v2734 = vadd.f32 %v2598, %v2733
    %v2735 = vpop.f32.mrf.mxu0
    %2736 = vmatprep.mubr.bf16.mxu0 0
    %2737 = vmatmul.mubr.bf16.gmra.mxu0 %v2568
    %v2738 = vpop.f32.mrf.mxu0
    %v2739 = vadd.f32 %v2598, %v2738
    %v2740 = vpop.f32.mrf.mxu0
    %v2741 = vpop.f32.mrf.mxu0
    %v2742 = vadd.f32 %v2598, %v2741
    %v2743 = vpop.f32.mrf.mxu0
    %2744 = vmatprep.mubr.bf16.mxu0 0
    %2745 = vmatmul.mubr.bf16.gmra.mxu0 %v2569
    %v2746 = vpop.f32.mrf.mxu0
    %v2747 = vadd.f32 %v2598, %v2746
    %v2748 = vpop.f32.mrf.mxu0
    %v2749 = vpop.f32.mrf.mxu0
    %v2750 = vadd.f32 %v2598, %v2749
    %v2751 = vpop.f32.mrf.mxu0
    %2752 = vmatprep.mubr.bf16.mxu0 0
    %2753 = vmatmul.mubr.bf16.gmra.mxu0 %v2570
    %v2754 = vpop.f32.mrf.mxu0
    %v2755 = vadd.f32 %v2598, %v2754
    %v2756 = vpop.f32.mrf.mxu0
    %v2757 = vpop.f32.mrf.mxu0
    %v2758 = vadd.f32 %v2598, %v2757
    %v2759 = vpop.f32.mrf.mxu0
    %2760 = vmatprep.mubr.bf16.mxu0 0
    %2761 = vmatmul.mubr.bf16.gmra.mxu0 %v2571
    %v2762 = vpop.f32.mrf.mxu0
    %v2763 = vadd.f32 %v2598, %v2762
    %v2764 = vpop.f32.mrf.mxu0
    %v2765 = vpop.f32.mrf.mxu0
    %v2766 = vadd.f32 %v2598, %v2765
    %v2767 = vpop.f32.mrf.mxu0
    %2768 = vmatprep.mubr.bf16.mxu0 0
    %2769 = vmatmul.mubr.bf16.gmra.mxu0 %v2572
    %v2770 = vpop.f32.mrf.mxu0
    %v2771 = vadd.f32 %v2598, %v2770
    %v2772 = vpop.f32.mrf.mxu0
    %v2773 = vpop.f32.mrf.mxu0
    %v2774 = vadd.f32 %v2598, %v2773
    %v2775 = vpop.f32.mrf.mxu0
    %2776 = vmatprep.mubr.bf16.mxu0 0
    %2777 = vmatmul.mubr.bf16.gmra.mxu0 %v2573
    %v2778 = vpop.f32.mrf.mxu0
    %v2779 = vadd.f32 %v2598, %v2778
    %v2780 = vpop.f32.mrf.mxu0
    %v2781 = vpop.f32.mrf.mxu0
    %v2782 = vadd.f32 %v2598, %v2781
    %v2783 = vpop.f32.mrf.mxu0
    %2784 = vmatprep.mubr.bf16.mxu0 0
    %2785 = vmatmul.mubr.bf16.gmra.mxu0 %v2574
    %v2786 = vpop.f32.mrf.mxu0
    %v2787 = vadd.f32 %v2598, %v2786
    %v2788 = vpop.f32.mrf.mxu0
    %v2789 = vpop.f32.mrf.mxu0
    %v2790 = vadd.f32 %v2598, %v2789
    %v2791 = vpop.f32.mrf.mxu0
    %2792 = vmatprep.mubr.bf16.mxu0 0
    %2793 = vmatmul.mubr.bf16.gmra.mxu0 %v2575
    %v2794 = vpop.f32.mrf.mxu0
    %v2795 = vadd.f32 %v2598, %v2794
    %v2796 = vpop.f32.mrf.mxu0
    %v2797 = vpop.f32.mrf.mxu0
    %v2798 = vadd.f32 %v2598, %v2797
    %v2799 = vpop.f32.mrf.mxu0
    %2800 = vmatprep.mubr.bf16.mxu0 0
    %2801 = vmatmul.mubr.bf16.gmra.mxu0 %v2576
    %v2802 = vpop.f32.mrf.mxu0
    %v2803 = vadd.f32 %v2598, %v2802
    %v2804 = vpop.f32.mrf.mxu0
    %v2805 = vpop.f32.mrf.mxu0
    %v2806 = vadd.f32 %v2598, %v2805
    %v2807 = vpop.f32.mrf.mxu0
    %2808 = vdwg.mxu0
    %2809 = vmax.xlane.f32.xlu0 %v2683
    %v2810 = vpop.xlane.xlu0 %2809
    %2811 = vmax.xlane.f32.xlu0 %v2686
    %v2812 = vpop.xlane.xlu0 %2811
    %2813 = vmax.xlane.f32.xlu0 %v2691
    %v2814 = vpop.xlane.xlu0 %2813
    %2815 = vmax.xlane.f32.xlu0 %v2694
    %v2816 = vpop.xlane.xlu0 %2815
    %2817 = vmax.xlane.f32.xlu0 %v2699
    %v2818 = vpop.xlane.xlu0 %2817
    %2819 = vmax.xlane.f32.xlu0 %v2702
    %v2820 = vpop.xlane.xlu0 %2819
    %2821 = vmax.xlane.f32.xlu0 %v2707
    %v2822 = vpop.xlane.xlu0 %2821
    %2823 = vmax.xlane.f32.xlu0 %v2710
    %v2824 = vpop.xlane.xlu0 %2823
    %2825 = vmax.xlane.f32.xlu0 %v2715
    %v2826 = vpop.xlane.xlu0 %2825
    %2827 = vmax.xlane.f32.xlu0 %v2718
    %v2828 = vpop.xlane.xlu0 %2827
    %2829 = vmax.xlane.f32.xlu0 %v2723
    %v2830 = vpop.xlane.xlu0 %2829
    %2831 = vmax.xlane.f32.xlu0 %v2726
    %v2832 = vpop.xlane.xlu0 %2831
    %2833 = vmax.xlane.f32.xlu0 %v2731
    %v2834 = vpop.xlane.xlu0 %2833
    %2835 = vmax.xlane.f32.xlu0 %v2734
    %v2836 = vpop.xlane.xlu0 %2835
    %2837 = vmax.xlane.f32.xlu0 %v2739
    %v2838 = vpop.xlane.xlu0 %2837
    %2839 = vmax.xlane.f32.xlu0 %v2742
    %v2840 = vpop.xlane.xlu0 %2839
    %2841 = vmax.xlane.f32.xlu0 %v2747
    %v2842 = vpop.xlane.xlu0 %2841
    %2843 = vmax.xlane.f32.xlu0 %v2750
    %v2844 = vpop.xlane.xlu0 %2843
    %2845 = vmax.xlane.f32.xlu0 %v2755
    %v2846 = vpop.xlane.xlu0 %2845
    %2847 = vmax.xlane.f32.xlu0 %v2758
    %v2848 = vpop.xlane.xlu0 %2847
    %2849 = vmax.xlane.f32.xlu0 %v2763
    %v2850 = vpop.xlane.xlu0 %2849
    %2851 = vmax.xlane.f32.xlu0 %v2766
    %v2852 = vpop.xlane.xlu0 %2851
    %2853 = vmax.xlane.f32.xlu0 %v2771
    %v2854 = vpop.xlane.xlu0 %2853
    %2855 = vmax.xlane.f32.xlu0 %v2774
    %v2856 = vpop.xlane.xlu0 %2855
    %2857 = vmax.xlane.f32.xlu0 %v2779
    %v2858 = vpop.xlane.xlu0 %2857
    %2859 = vmax.xlane.f32.xlu0 %v2782
    %v2860 = vpop.xlane.xlu0 %2859
    %2861 = vmax.xlane.f32.xlu0 %v2787
    %v2862 = vpop.xlane.xlu0 %2861
    %2863 = vmax.xlane.f32.xlu0 %v2790
    %v2864 = vpop.xlane.xlu0 %2863
    %2865 = vmax.xlane.f32.xlu0 %v2795
    %v2866 = vpop.xlane.xlu0 %2865
    %2867 = vmax.xlane.f32.xlu0 %v2798
    %v2868 = vpop.xlane.xlu0 %2867
    %2869 = vmax.xlane.f32.xlu0 %v2803
    %v2870 = vpop.xlane.xlu0 %2869
    %2871 = vmax.xlane.f32.xlu0 %v2806
    %v2872 = vpop.xlane.xlu0 %2871
    %v2873 = vsub.f32 %v2683, %v2810
    %v2874 = vsub.f32 %v2686, %v2812
    %v2875 = vsub.f32 %v2691, %v2814
    %v2876 = vsub.f32 %v2694, %v2816
    %v2877 = vsub.f32 %v2699, %v2818
    %v2878 = vsub.f32 %v2702, %v2820
    %v2879 = vsub.f32 %v2707, %v2822
    %v2880 = vsub.f32 %v2710, %v2824
    %v2881 = vsub.f32 %v2715, %v2826
    %v2882 = vsub.f32 %v2718, %v2828
    %v2883 = vsub.f32 %v2723, %v2830
    %v2884 = vsub.f32 %v2726, %v2832
    %v2885 = vsub.f32 %v2731, %v2834
    %v2886 = vsub.f32 %v2734, %v2836
    %v2887 = vsub.f32 %v2739, %v2838
    %v2888 = vsub.f32 %v2742, %v2840
    %v2889 = vsub.f32 %v2747, %v2842
    %v2890 = vsub.f32 %v2750, %v2844
    %v2891 = vsub.f32 %v2755, %v2846
    %v2892 = vsub.f32 %v2758, %v2848
    %v2893 = vsub.f32 %v2763, %v2850
    %v2894 = vsub.f32 %v2766, %v2852
    %v2895 = vsub.f32 %v2771, %v2854
    %v2896 = vsub.f32 %v2774, %v2856
    %v2897 = vsub.f32 %v2779, %v2858
    %v2898 = vsub.f32 %v2782, %v2860
    %v2899 = vsub.f32 %v2787, %v2862
    %v2900 = vsub.f32 %v2790, %v2864
    %v2901 = vsub.f32 %v2795, %v2866
    %v2902 = vsub.f32 %v2798, %v2868
    %v2903 = vsub.f32 %v2803, %v2870
    %v2904 = vsub.f32 %v2806, %v2872
    %v2905 = vmul.f32 %v2873, 1.442695
    %v2906 = vpow.pop %v2905
    %v2907 = vmul.f32 %v2874, 1.442695
    %v2908 = vpow.pop %v2907
    %v2909 = vmul.f32 %v2875, 1.442695
    %v2910 = vpow.pop %v2909
    %v2911 = vmul.f32 %v2876, 1.442695
    %v2912 = vpow.pop %v2911
    %v2913 = vmul.f32 %v2877, 1.442695
    %v2914 = vpow.pop %v2913
    %v2915 = vmul.f32 %v2878, 1.442695
    %v2916 = vpow.pop %v2915
    %v2917 = vmul.f32 %v2879, 1.442695
    %v2918 = vpow.pop %v2917
    %v2919 = vmul.f32 %v2880, 1.442695
    %v2920 = vpow.pop %v2919
    %v2921 = vmul.f32 %v2881, 1.442695
    %v2922 = vpow.pop %v2921
    %v2923 = vmul.f32 %v2882, 1.442695
    %v2924 = vpow.pop %v2923
    %v2925 = vmul.f32 %v2883, 1.442695
    %v2926 = vpow.pop %v2925
    %v2927 = vmul.f32 %v2884, 1.442695
    %v2928 = vpow.pop %v2927
    %v2929 = vmul.f32 %v2885, 1.442695
    %v2930 = vpow.pop %v2929
    %v2931 = vmul.f32 %v2886, 1.442695
    %v2932 = vpow.pop %v2931
    %v2933 = vmul.f32 %v2887, 1.442695
    %v2934 = vpow.pop %v2933
    %v2935 = vmul.f32 %v2888, 1.442695
    %v2936 = vpow.pop %v2935
    %v2937 = vmul.f32 %v2889, 1.442695
    %v2938 = vpow.pop %v2937
    %v2939 = vmul.f32 %v2890, 1.442695
    %v2940 = vpow.pop %v2939
    %v2941 = vmul.f32 %v2891, 1.442695
    %v2942 = vpow.pop %v2941
    %v2943 = vmul.f32 %v2892, 1.442695
    %v2944 = vpow.pop %v2943
    %v2945 = vmul.f32 %v2893, 1.442695
    %v2946 = vpow.pop %v2945
    %v2947 = vmul.f32 %v2894, 1.442695
    %v2948 = vpow.pop %v2947
    %v2949 = vmul.f32 %v2895, 1.442695
    %v2950 = vpow.pop %v2949
    %v2951 = vmul.f32 %v2896, 1.442695
    %v2952 = vpow.pop %v2951
    %v2953 = vmul.f32 %v2897, 1.442695
    %v2954 = vpow.pop %v2953
    %v2955 = vmul.f32 %v2898, 1.442695
    %v2956 = vpow.pop %v2955
    %v2957 = vmul.f32 %v2899, 1.442695
    %v2958 = vpow.pop %v2957
    %v2959 = vmul.f32 %v2900, 1.442695
    %v2960 = vpow.pop %v2959
    %v2961 = vmul.f32 %v2901, 1.442695
    %v2962 = vpow.pop %v2961
    %v2963 = vmul.f32 %v2902, 1.442695
    %v2964 = vpow.pop %v2963
    %v2965 = vmul.f32 %v2903, 1.442695
    %v2966 = vpow.pop %v2965
    %v2967 = vmul.f32 %v2904, 1.442695
    %v2968 = vpow.pop %v2967
    %2969 = vadd.xlane.f32.xlu0 %v2906
    %v2970 = vpop.xlane.xlu0 %2969
    %2971 = vadd.xlane.f32.xlu0 %v2908
    %v2972 = vpop.xlane.xlu0 %2971
    %2973 = vadd.xlane.f32.xlu0 %v2910
    %v2974 = vpop.xlane.xlu0 %2973
    %2975 = vadd.xlane.f32.xlu0 %v2912
    %v2976 = vpop.xlane.xlu0 %2975
    %2977 = vadd.xlane.f32.xlu0 %v2914
    %v2978 = vpop.xlane.xlu0 %2977
    %2979 = vadd.xlane.f32.xlu0 %v2916
    %v2980 = vpop.xlane.xlu0 %2979
    %2981 = vadd.xlane.f32.xlu0 %v2918
    %v2982 = vpop.xlane.xlu0 %2981
    %2983 = vadd.xlane.f32.xlu0 %v2920
    %v2984 = vpop.xlane.xlu0 %2983
    %2985 = vadd.xlane.f32.xlu0 %v2922
    %v2986 = vpop.xlane.xlu0 %2985
    %2987 = vadd.xlane.f32.xlu0 %v2924
    %v2988 = vpop.xlane.xlu0 %2987
    %2989 = vadd.xlane.f32.xlu0 %v2926
    %v2990 = vpop.xlane.xlu0 %2989
    %2991 = vadd.xlane.f32.xlu0 %v2928
    %v2992 = vpop.xlane.xlu0 %2991
    %2993 = vadd.xlane.f32.xlu0 %v2930
    %v2994 = vpop.xlane.xlu0 %2993
    %2995 = vadd.xlane.f32.xlu0 %v2932
    %v2996 = vpop.xlane.xlu0 %2995
    %2997 = vadd.xlane.f32.xlu0 %v2934
    %v2998 = vpop.xlane.xlu0 %2997
    %2999 = vadd.xlane.f32.xlu0 %v2936
    %v3000 = vpop.xlane.xlu0 %2999
    %3001 = vadd.xlane.f32.xlu0 %v2938
    %v3002 = vpop.xlane.xlu0 %3001
    %3003 = vadd.xlane.f32.xlu0 %v2940
    %v3004 = vpop.xlane.xlu0 %3003
    %3005 = vadd.xlane.f32.xlu0 %v2942
    %v3006 = vpop.xlane.xlu0 %3005
    %3007 = vadd.xlane.f32.xlu0 %v2944
    %v3008 = vpop.xlane.xlu0 %3007
    %3009 = vadd.xlane.f32.xlu0 %v2946
    %v3010 = vpop.xlane.xlu0 %3009
    %3011 = vadd.xlane.f32.xlu0 %v2948
    %v3012 = vpop.xlane.xlu0 %3011
    %3013 = vadd.xlane.f32.xlu0 %v2950
    %v3014 = vpop.xlane.xlu0 %3013
    %3015 = vadd.xlane.f32.xlu0 %v2952
    %v3016 = vpop.xlane.xlu0 %3015
    %3017 = vadd.xlane.f32.xlu0 %v2954
    %v3018 = vpop.xlane.xlu0 %3017
    %3019 = vadd.xlane.f32.xlu0 %v2956
    %v3020 = vpop.xlane.xlu0 %3019
    %3021 = vadd.xlane.f32.xlu0 %v2958
    %v3022 = vpop.xlane.xlu0 %3021
    %3023 = vadd.xlane.f32.xlu0 %v2960
    %v3024 = vpop.xlane.xlu0 %3023
    %3025 = vadd.xlane.f32.xlu0 %v2962
    %v3026 = vpop.xlane.xlu0 %3025
    %3027 = vadd.xlane.f32.xlu0 %v2964
    %v3028 = vpop.xlane.xlu0 %3027
    %3029 = vadd.xlane.f32.xlu0 %v2966
    %v3030 = vpop.xlane.xlu0 %3029
    %3031 = vadd.xlane.f32.xlu0 %v2968
    %v3032 = vpop.xlane.xlu0 %3031
    %v3033 = vrcp.pop %v2970
    %v3034 = vrcp.pop %v2972
    %v3035 = vrcp.pop %v2974
    %v3036 = vrcp.pop %v2976
    %v3037 = vrcp.pop %v2978
    %v3038 = vrcp.pop %v2980
    %v3039 = vrcp.pop %v2982
    %v3040 = vrcp.pop %v2984
    %v3041 = vrcp.pop %v2986
    %v3042 = vrcp.pop %v2988
    %v3043 = vrcp.pop %v2990
    %v3044 = vrcp.pop %v2992
    %v3045 = vrcp.pop %v2994
    %v3046 = vrcp.pop %v2996
    %v3047 = vrcp.pop %v2998
    %v3048 = vrcp.pop %v3000
    %v3049 = vrcp.pop %v3002
    %v3050 = vrcp.pop %v3004
    %v3051 = vrcp.pop %v3006
    %v3052 = vrcp.pop %v3008
    %v3053 = vrcp.pop %v3010
    %v3054 = vrcp.pop %v3012
    %v3055 = vrcp.pop %v3014
    %v3056 = vrcp.pop %v3016
    %v3057 = vrcp.pop %v3018
    %v3058 = vrcp.pop %v3020
    %v3059 = vrcp.pop %v3022
    %v3060 = vrcp.pop %v3024
    %v3061 = vrcp.pop %v3026
    %v3062 = vrcp.pop %v3028
    %v3063 = vrcp.pop %v3030
    %v3064 = vrcp.pop %v3032
    %v3065 = vmul.f32 %v2906, %v3033
    %v3066 = vmul.f32 %v2908, %v3034
    %v3067 = vmul.f32 %v2910, %v3035
    %v3068 = vmul.f32 %v2912, %v3036
    %v3069 = vmul.f32 %v2914, %v3037
    %v3070 = vmul.f32 %v2916, %v3038
    %v3071 = vmul.f32 %v2918, %v3039
    %v3072 = vmul.f32 %v2920, %v3040
    %v3073 = vmul.f32 %v2922, %v3041
    %v3074 = vmul.f32 %v2924, %v3042
    %v3075 = vmul.f32 %v2926, %v3043
    %v3076 = vmul.f32 %v2928, %v3044
    %v3077 = vmul.f32 %v2930, %v3045
    %v3078 = vmul.f32 %v2932, %v3046
    %v3079 = vmul.f32 %v2934, %v3047
    %v3080 = vmul.f32 %v2936, %v3048
    %v3081 = vmul.f32 %v2938, %v3049
    %v3082 = vmul.f32 %v2940, %v3050
    %v3083 = vmul.f32 %v2942, %v3051
    %v3084 = vmul.f32 %v2944, %v3052
    %v3085 = vmul.f32 %v2946, %v3053
    %v3086 = vmul.f32 %v2948, %v3054
    %v3087 = vmul.f32 %v2950, %v3055
    %v3088 = vmul.f32 %v2952, %v3056
    %v3089 = vmul.f32 %v2954, %v3057
    %v3090 = vmul.f32 %v2956, %v3058
    %v3091 = vmul.f32 %v2958, %v3059
    %v3092 = vmul.f32 %v2960, %v3060
    %v3093 = vmul.f32 %v2962, %v3061
    %v3094 = vmul.f32 %v2964, %v3062
    %v3095 = vmul.f32 %v2966, %v3063
    %v3096 = vmul.f32 %v2968, %v3064
    %3097 = vst [vmem:[#allocation2] sm:$0xff] %v3065
    %3098 = vst [vmem:[#allocation2 + $0x8] sm:$0xff] %v3066
    %3099 = vst [vmem:[#allocation2 + $0x10] sm:$0xff] %v3067
    %3100 = vst [vmem:[#allocation2 + $0x18] sm:$0xff] %v3068
    %3101 = vst [vmem:[#allocation2 + $0x20] sm:$0xff] %v3069
    %3102 = vst [vmem:[#allocation2 + $0x28] sm:$0xff] %v3070
    %3103 = vst [vmem:[#allocation2 + $0x30] sm:$0xff] %v3071
    %3104 = vst [vmem:[#allocation2 + $0x38] sm:$0xff] %v3072
    %3105 = vst [vmem:[#allocation2 + $0x40] sm:$0xff] %v3073
    %3106 = vst [vmem:[#allocation2 + $0x48] sm:$0xff] %v3074
    %3107 = vst [vmem:[#allocation2 + $0x50] sm:$0xff] %v3075
    %3108 = vst [vmem:[#allocation2 + $0x58] sm:$0xff] %v3076
    %3109 = vst [vmem:[#allocation2 + $0x60] sm:$0xff] %v3077
    %3110 = vst [vmem:[#allocation2 + $0x68] sm:$0xff] %v3078
    %3111 = vst [vmem:[#allocation2 + $0x70] sm:$0xff] %v3079
    %3112 = vst [vmem:[#allocation2 + $0x78] sm:$0xff] %v3080
    %3113 = vst [vmem:[#allocation2 + $0x80] sm:$0xff] %v3081
    %3114 = vst [vmem:[#allocation2 + $0x88] sm:$0xff] %v3082
    %3115 = vst [vmem:[#allocation2 + $0x90] sm:$0xff] %v3083
    %3116 = vst [vmem:[#allocation2 + $0x98] sm:$0xff] %v3084
    %3117 = vst [vmem:[#allocation2 + $0xa0] sm:$0xff] %v3085
    %3118 = vst [vmem:[#allocation2 + $0xa8] sm:$0xff] %v3086
    %3119 = vst [vmem:[#allocation2 + $0xb0] sm:$0xff] %v3087
    %3120 = vst [vmem:[#allocation2 + $0xb8] sm:$0xff] %v3088
    %3121 = vst [vmem:[#allocation2 + $0xc0] sm:$0xff] %v3089
    %3122 = vst [vmem:[#allocation2 + $0xc8] sm:$0xff] %v3090
    %3123 = vst [vmem:[#allocation2 + $0xd0] sm:$0xff] %v3091
    %3124 = vst [vmem:[#allocation2 + $0xd8] sm:$0xff] %v3092
    %3125 = vst [vmem:[#allocation2 + $0xe0] sm:$0xff] %v3093
    %3126 = vst [vmem:[#allocation2 + $0xe8] sm:$0xff] %v3094
    %3127 = vst [vmem:[#allocation2 + $0xf0] sm:$0xff] %v3095
    %3128 = vst [vmem:[#allocation2 + $0xf8] sm:$0xff] %v3096
    // Predicated region
    $region30: #{tpu_custom_call.1} parent=1 // pred_check
      _
    $region31: #{tpu_custom_call.1} parent=1 // pred_check_branch
      %3130 = sbr.rel (0) target = $region33
    $region32: #{tpu_custom_call.1} parent=1 // pred_region
      %s3132 = ssub.s32 4096, 4096
      %3133 = vsyncadd [#allocation3], %s3132
      %s3134 = sshll.u32 [#allocation2], 4
      %s3135 = int_to_ptr.vmem [resolvable:$true] %s3134
      %3140 = dma.vmem_to_hbm [thread:$0]  %s3135, 4096, %s7, [#allocation3], 128, 128, 8
    $region33: #{tpu_custom_call.1} parent=1 // pred_fallthru
      _
    // Predicated region
    $region34: #{tpu_custom_call.1} parent=1 // pred_check
      _
    $region35: #{tpu_custom_call.1} parent=1 // pred_check_branch
      %3142 = sbr.rel (0) target = $region37
    $region36: #{tpu_custom_call.1} parent=1 // pred_region
      %3143 = dma.done [#allocation3], 4096
    $region37: #{tpu_custom_call.1} parent=1 // pred_fallthru
      _
    %3144 = vsyncpa [#allocation3], 1

</llo_original>
